<compile_context>
chip_gen: v7x
topology: tpu7x:2x2x1
jax: 0.10.0
libtpu: 0.0.40
codegen_flags: <defaults>
</compile_context>

<pallas_src>
import functools

import jax
import jax.numpy as jnp
from jax import lax
from jax.experimental import pallas as pl
from jax.experimental.pallas import tpu as pltpu

EPS = 1e-5          # BatchNorm2d default eps
NEG_SLOPE = 0.01    # nn.LeakyReLU default negative_slope


def _vmem_limit_and_tile_cap():
    """Per-chip VMEM budget and lane-tile cap (v5e/v6e: 128 MiB physical VMEM,
    v7x: 64 MiB)."""
    try:
        kind = jax.devices()[0].device_kind.lower()
    except Exception:
        kind = ""
    if ("v5" in kind) or ("v6" in kind):
        return 96 * 1024 * 1024, 32768
    return 48 * 1024 * 1024, 16384      # v7x-safe default


def _pick_hw_tile(hw, max_tile):
    """Largest lane-aligned tile that exactly divides hw (keeps BN sums exact).
    TODO(synk): if hw has no 128-multiple divisor <= max_tile we fall back to a
    single hw-wide tile; pad HW to a multiple of 128 + mask for huge odd images."""
    if hw <= max_tile:
        return hw
    t = max_tile - (max_tile % 128)
    while t >= 128:
        if hw % t == 0:
            return t
        t -= 128
    return hw


def _apply_pointwise(pw, h, use_vpu):
    """(Cout, Cin) @ (Cin, T) -> (Cout, T).

    For tiny channel counts do Cin broadcast-FMAs on the VPU over lane-dense
    (Cout, T) tiles instead of pushing a tiny matmul through the MXU; otherwise
    use the MXU."""
    if use_vpu:
        cin = pw.shape[1]
        acc = pw[:, 0:1] * h[0:1, :]
        for ci in range(1, cin):
            acc = acc + pw[:, ci:ci + 1] * h[ci:ci + 1, :]
        return acc
    return jnp.dot(pw, h, preferred_element_type=jnp.float32)


# ---------------------------------------------------------------------------
# Pass 1: depthwise conv (groups == Cin, no bias) + partial BN1 statistics.
# Grid over batch images ("parallel").  Zero padding is built in a VMEM halo
# scratch (no wrapper jnp.pad).  The conv result is flattened to pixel-minor
# (Cin, OH*OW) before the store so the store and downstream work are lane-dense.
# ---------------------------------------------------------------------------
def _dw_stats_kernel(x_ref, dwt_ref, y1_ref, s_ref, ss_ref, xp_ref, *,
                     kh_sz, kw_sz, stride, pad, oh, ow):
    cin, h, w = x_ref.shape[1], x_ref.shape[2], x_ref.shape[3]
    # Zero halo + copy interior into the VMEM scratch (padding fused in-kernel).
    xp_ref[...] = jnp.zeros_like(xp_ref)
    xp_ref[:, pad:pad + h, pad:pad + w] = x_ref[0]
    xp = xp_ref[...]                                   # (Cin, Hp, Wp)
    dwt = dwt_ref[...]                                 # (Cin, KK) loaded once

    acc = None
    tap = 0
    for kh in range(kh_sz):
        for kw in range(kw_sz):
            patch = xp[:, kh:kh + (oh - 1) * stride + 1:stride,
                          kw:kw + (ow - 1) * stride + 1:stride]
            w_tap = dwt[:, tap:tap + 1][:, :, None]    # (Cin, 1, 1)
            contrib = patch * w_tap
            acc = contrib if acc is None else acc + contrib
            tap += 1

    # TODO(synk): for OW < 128 the tap slices / reshape still trigger cross-lane
    # relayouts; a flattened pltpu.roll-based tap formulation (and row-tiling
    # with a halo'd window for large H*W) would keep this lane-dense end to end.
    y = acc.reshape(cin, oh * ow)                      # pixel-minor, lane-dense
    y1_ref[0] = y
    s_ref[0] = jnp.sum(y, axis=1, keepdims=True)       # partial sum   (BN1)
    ss_ref[0] = jnp.sum(y * y, axis=1, keepdims=True)  # partial sumsq (BN1)


# ---------------------------------------------------------------------------
# Pass 2: BN1 folded to one FMA + LeakyReLU + 1x1 conv; emits ONLY partial BN2
# statistics (no y2 write to HBM).  Grid over (batch, pixel tiles), "parallel".
# ---------------------------------------------------------------------------
def _bn1_pw_stats_kernel(y1_ref, sc1_ref, sh1_ref, pw_ref, s_ref, ss_ref, *,
                         use_vpu):
    h = y1_ref[0] * sc1_ref[...] + sh1_ref[...]                  # (Cin, T)
    h = jnp.where(h > 0, h, NEG_SLOPE * h)
    y2 = _apply_pointwise(pw_ref[...], h, use_vpu)               # (Cout, T)
    s_ref[0] = jnp.sum(y2, axis=1, keepdims=True)
    ss_ref[0] = jnp.sum(y2 * y2, axis=1, keepdims=True)


# ---------------------------------------------------------------------------
# Pass 3: re-read y1, recompute BN1+LReLU+1x1 (cheap), apply BN2 FMA + LeakyReLU,
# store the lane-dense output.
# ---------------------------------------------------------------------------
def _bn2_out_kernel(y1_ref, sc1_ref, sh1_ref, pw_ref, sc2_ref, sh2_ref, o_ref, *,
                    use_vpu):
    h = y1_ref[0] * sc1_ref[...] + sh1_ref[...]
    h = jnp.where(h > 0, h, NEG_SLOPE * h)
    y2 = _apply_pointwise(pw_ref[...], h, use_vpu)
    y = y2 * sc2_ref[...] + sh2_ref[...]
    o_ref[0] = jnp.where(y > 0, y, NEG_SLOPE * y)


def _bn_fold(s, ss, count, gamma, beta):
    """Fold training-mode batch stats into scale/shift so BN is one FMA.
    TODO(synk): E[x^2]-E[x]^2 can cancel for large-mean activations; use a
    shifted / Welford-style reduction if inputs are far from zero-mean."""
    mean = s / count                                   # (C, 1)
    var = ss / count - mean * mean                     # biased variance
    scale = gamma.reshape(-1, 1).astype(jnp.float32) * lax.rsqrt(var + EPS)
    shift = beta.reshape(-1, 1).astype(jnp.float32) - mean * scale
    return scale, shift


@functools.partial(jax.jit, static_argnames=("kernel_size", "stride"))
def conv_dw_block(x_nchw, dw_w, pw_w, gamma1, beta1, gamma2, beta2,
                  *, kernel_size, stride):
    """x_nchw: (N, Cin, H, W); dw_w: (KH, KW, Cin); pw_w: (Cin, Cout). NCHW out."""
    n, cin, h, w = x_nchw.shape
    pad = stride  # the module passes `stride` as Conv2d padding; ctor `padding` unused
    oh = (h + 2 * pad - kernel_size) // stride + 1
    ow = (w + 2 * pad - kernel_size) // stride + 1
    hw = oh * ow
    cout = pw_w.shape[-1]
    hp, wp = h + 2 * pad, w + 2 * pad
    kk = kernel_size * kernel_size

    vmem_limit, max_tile = _vmem_limit_and_tile_cap()
    use_vpu_pw = (cin <= 16) and (cout <= 16)

    x = x_nchw.astype(jnp.float32)                                 # stay NCHW
    dwt = jnp.transpose(dw_w.reshape(kk, cin), (1, 0)).astype(jnp.float32)  # (Cin, KK)
    pwt = jnp.transpose(pw_w, (1, 0)).astype(jnp.float32)                   # (Cout, Cin)

    # ---- Pass 1: depthwise conv + partial BN1 stats --------------------------
    y1, s1, ss1 = pl.pallas_call(
        functools.partial(_dw_stats_kernel, kh_sz=kernel_size, kw_sz=kernel_size,
                          stride=stride, pad=pad, oh=oh, ow=ow),
        grid=(n,),
        in_specs=[
            pl.BlockSpec((1, cin, h, w), lambda i: (i, 0, 0, 0)),
            pl.BlockSpec((cin, kk), lambda i: (0, 0)),
        ],
        out_specs=(
            pl.BlockSpec((1, cin, hw), lambda i: (i, 0, 0)),
            pl.BlockSpec((1, cin, 1), lambda i: (i, 0, 0)),
            pl.BlockSpec((1, cin, 1), lambda i: (i, 0, 0)),
        ),
        out_shape=(
            jax.ShapeDtypeStruct((n, cin, hw), jnp.float32),
            jax.ShapeDtypeStruct((n, cin, 1), jnp.float32),
            jax.ShapeDtypeStruct((n, cin, 1), jnp.float32),
        ),
        scratch_shapes=[pltpu.VMEM((cin, hp, wp), jnp.float32)],   # padded halo
        compiler_params=pltpu.CompilerParams(
            dimension_semantics=("parallel",),
            vmem_limit_bytes=vmem_limit),
    )(x, dwt)

    count = float(n * hw)
    sc1, sh1 = _bn_fold(jnp.sum(s1, axis=0), jnp.sum(ss1, axis=0), count,
                        gamma1, beta1)

    t_hw = _pick_hw_tile(hw, max_tile)
    n_t = hw // t_hw
    grid23 = (n, n_t)

    # ---- Pass 2: BN1 + LeakyReLU + 1x1 conv -> ONLY partial BN2 stats --------
    # (y2 is never written to HBM; pass 3 recomputes it.)
    s2, ss2 = pl.pallas_call(
        functools.partial(_bn1_pw_stats_kernel, use_vpu=use_vpu_pw),
        grid=grid23,
        in_specs=[
            pl.BlockSpec((1, cin, t_hw), lambda i, j: (i, 0, j)),
            pl.BlockSpec((cin, 1), lambda i, j: (0, 0)),
            pl.BlockSpec((cin, 1), lambda i, j: (0, 0)),
            pl.BlockSpec((cout, cin), lambda i, j: (0, 0)),
        ],
        out_specs=(
            pl.BlockSpec((1, cout, 1), lambda i, j: (i * n_t + j, 0, 0)),
            pl.BlockSpec((1, cout, 1), lambda i, j: (i * n_t + j, 0, 0)),
        ),
        out_shape=(
            jax.ShapeDtypeStruct((n * n_t, cout, 1), jnp.float32),
            jax.ShapeDtypeStruct((n * n_t, cout, 1), jnp.float32),
        ),
        compiler_params=pltpu.CompilerParams(
            dimension_semantics=("parallel", "parallel"),
            vmem_limit_bytes=vmem_limit),
    )(y1, sc1, sh1, pwt)

    sc2, sh2 = _bn_fold(jnp.sum(s2, axis=0), jnp.sum(ss2, axis=0), count,
                        gamma2, beta2)

    # ---- Pass 3: re-read y1, recompute BN1+LReLU+1x1, apply BN2+LReLU --------
    # TODO(synk): store y1 in bfloat16 (keeping f32 stats/accumulation in-kernel)
    # to halve the dominant activation HBM stream once tolerance is validated.
    out = pl.pallas_call(
        functools.partial(_bn2_out_kernel, use_vpu=use_vpu_pw),
        grid=grid23,
        in_specs=[
            pl.BlockSpec((1, cin, t_hw), lambda i, j: (i, 0, j)),
            pl.BlockSpec((cin, 1), lambda i, j: (0, 0)),
            pl.BlockSpec((cin, 1), lambda i, j: (0, 0)),
            pl.BlockSpec((cout, cin), lambda i, j: (0, 0)),
            pl.BlockSpec((cout, 1), lambda i, j: (0, 0)),
            pl.BlockSpec((cout, 1), lambda i, j: (0, 0)),
        ],
        out_specs=pl.BlockSpec((1, cout, t_hw), lambda i, j: (i, 0, j)),
        out_shape=jax.ShapeDtypeStruct((n, cout, hw), jnp.float32),
        compiler_params=pltpu.CompilerParams(
            dimension_semantics=("parallel", "parallel"),
            vmem_limit_bytes=vmem_limit),
    )(y1, sc1, sh1, pwt, sc2, sh2)

    return out.reshape(n, cout, oh, ow)   # (N, Cout, OH*OW) -> NCHW, free reshape


def conv_dw_block_reference(x_nchw, dw_w, pw_w, gamma1, beta1, gamma2, beta2,
                            *, kernel_size, stride):
    """Pure-JAX reference (lax.conv) mirroring the PyTorch forward."""
    pad = stride
    cin = x_nchw.shape[1]
    dw_oihw = jnp.transpose(dw_w, (2, 0, 1))[:, None, :, :]     # (Cin, 1, KH, KW)
    pw_oihw = jnp.transpose(pw_w, (1, 0))[:, :, None, None]     # (Cout, Cin, 1, 1)

    def bn_lrelu(z, g, b):
        m = jnp.mean(z, axis=(0, 2, 3), keepdims=True)
        v = jnp.mean((z - m) ** 2, axis=(0, 2, 3), keepdims=True)
        z = (z - m) / jnp.sqrt(v + EPS) * g[None, :, None, None] + b[None, :, None, None]
        return jnp.where(z > 0, z, NEG_SLOPE * z)

    y = lax.conv_general_dilated(x_nchw.astype(jnp.float32), dw_oihw,
                                 (stride, stride), [(pad, pad), (pad, pad)],
                                 dimension_numbers=('NCHW', 'OIHW', 'NCHW'),
                                 feature_group_count=cin)
    y = bn_lrelu(y, gamma1, beta1)
    y = lax.conv_general_dilated(y, pw_oihw, (1, 1), [(0, 0), (0, 0)],
                                 dimension_numbers=('NCHW', 'OIHW', 'NCHW'))
    return bn_lrelu(y, gamma2, beta2)


if __name__ == "__main__":
    # ConvDWBlock(in_channels=4, out_channels=8, kernel_size=3, stride=1, padding=5)
    # (the ctor `padding` argument is unused by the module; effective pad = stride)
    in_channels, out_channels, kernel_size, stride = 4, 8, 3, 1

    key = jax.random.PRNGKey(0)
    kx, kd, kp = jax.random.split(key, 3)
    x = jax.random.normal(kx, (2, in_channels, 16, 16), dtype=jnp.float32)

    # Deterministic parameter init (synthetic, not a checkpoint load).
    dw_w = 0.1 * jax.random.normal(kd, (kernel_size, kernel_size, in_channels),
                                   dtype=jnp.float32)          # depthwise weights
    pw_w = 0.1 * jax.random.normal(kp, (in_channels, out_channels),
                                   dtype=jnp.float32)          # 1x1 conv weights
    gamma1 = jnp.ones((in_channels,), jnp.float32)
    beta1 = jnp.zeros((in_channels,), jnp.float32)
    gamma2 = jnp.ones((out_channels,), jnp.float32)
    beta2 = jnp.zeros((out_channels,), jnp.float32)

    out = conv_dw_block(x, dw_w, pw_w, gamma1, beta1, gamma2, beta2,
                        kernel_size=kernel_size, stride=stride)
    out = jax.block_until_ready(out)

    ref = conv_dw_block_reference(x, dw_w, pw_w, gamma1, beta1, gamma2, beta2,
                                  kernel_size=kernel_size, stride=stride)
    ref = jax.block_until_ready(ref)

    assert out.shape == ref.shape, (out.shape, ref.shape)
    assert jnp.allclose(out, ref, atol=1e-3, rtol=1e-3), \
        float(jnp.max(jnp.abs(out - ref)))
    print("KERNEL_OK")
</pallas_src>

<mosaic_0001>
module attributes {stable_mosaic.version = 11 : i64} {
  func.func @_dw_stats_kernel(%arg0: i32, %arg1: memref<1x4x16x16xf32, #tpu.memory_space<vmem>>, %arg2: memref<4x9xf32, #tpu.memory_space<vmem>>, %arg3: memref<1x4x256xf32, #tpu.memory_space<vmem>>, %arg4: memref<1x4x1xf32, #tpu.memory_space<vmem>>, %arg5: memref<1x4x1xf32, #tpu.memory_space<vmem>>, %arg6: memref<4x18x18xf32, #tpu.memory_space<vmem>>) attributes {dimension_semantics = [#tpu.dimension_semantics<parallel>], iteration_bounds = array<i64: 2>, scalar_prefetch = 0 : i64, scratch_operands = 1 : i64, tpu.core_type = #tpu.core_type<tc>, window_params = [{transform_indices = @transform_0, window_bounds = array<i64: 1, 4, 16, 16>}, {pipeline_mode = #tpu.pipeline_mode<synchronous>, transform_indices = @transform_1, window_bounds = array<i64: 4, 9>}, {transform_indices = @transform_2, window_bounds = array<i64: 1, 4, 256>}, {transform_indices = @transform_3, window_bounds = array<i64: 1, 4, 1>}, {transform_indices = @transform_4, window_bounds = array<i64: 1, 4, 1>}]} {
    %cst = arith.constant 0.000000e+00 : f32
    %0 = vector.broadcast %cst : f32 to vector<4x18x18xf32>
    %c0 = arith.constant 0 : index
    %c0_0 = arith.constant 0 : index
    %c0_1 = arith.constant 0 : index
    %1 = vector.load %arg6[%c0, %c0_0, %c0_1] : memref<4x18x18xf32, #tpu.memory_space<vmem>>, vector<4x18x18xf32>
    tpu.vector_store %arg6[%c0, %c0_0, %c0_1], %0 {strides = array<i32>} : memref<4x18x18xf32, #tpu.memory_space<vmem>>, vector<4x18x18xf32>,
    %c0_2 = arith.constant 0 : index
    %c0_3 = arith.constant 0 : index
    %c0_4 = arith.constant 0 : index
    %c0_5 = arith.constant 0 : index
    %2 = vector.load %arg1[%c0_2, %c0_3, %c0_4, %c0_5] : memref<1x4x16x16xf32, #tpu.memory_space<vmem>>, vector<1x4x16x16xf32>
    %3 = vector.shape_cast %2 : vector<1x4x16x16xf32> to vector<4x16x16xf32>
    %c0_6 = arith.constant 0 : index
    %c1 = arith.constant 1 : index
    %c1_7 = arith.constant 1 : index
    %4 = vector.load %arg6[%c0_6, %c1, %c1_7] : memref<4x18x18xf32, #tpu.memory_space<vmem>>, vector<4x16x16xf32>
    tpu.vector_store %arg6[%c0_6, %c1, %c1_7], %3 {strides = array<i32>} : memref<4x18x18xf32, #tpu.memory_space<vmem>>, vector<4x16x16xf32>,
    %c0_8 = arith.constant 0 : index
    %c0_9 = arith.constant 0 : index
    %c0_10 = arith.constant 0 : index
    %5 = vector.load %arg6[%c0_8, %c0_9, %c0_10] : memref<4x18x18xf32, #tpu.memory_space<vmem>>, vector<4x18x18xf32>
    %c0_11 = arith.constant 0 : index
    %c0_12 = arith.constant 0 : index
    %6 = vector.load %arg2[%c0_11, %c0_12] : memref<4x9xf32, #tpu.memory_space<vmem>>, vector<4x9xf32>
    %7 = vector.extract_strided_slice %5 {offsets = [0, 0, 0], sizes = [4, 16, 16], strides = [1, 1, 1]} : vector<4x18x18xf32> to vector<4x16x16xf32>
    %8 = vector.extract_strided_slice %6 {offsets = [0, 0], sizes = [4, 1], strides = [1, 1]} : vector<4x9xf32> to vector<4x1xf32>
    %9 = vector.shape_cast %8 : vector<4x1xf32> to vector<4x1x1xf32>
    %10 = vector.broadcast %9 : vector<4x1x1xf32> to vector<4x16x16xf32>
    %11 = arith.mulf %7, %10 : vector<4x16x16xf32>
    %12 = vector.extract_strided_slice %5 {offsets = [0, 0, 1], sizes = [4, 16, 16], strides = [1, 1, 1]} : vector<4x18x18xf32> to vector<4x16x16xf32>
    %13 = vector.extract_strided_slice %6 {offsets = [0, 1], sizes = [4, 1], strides = [1, 1]} : vector<4x9xf32> to vector<4x1xf32>
    %14 = vector.shape_cast %13 : vector<4x1xf32> to vector<4x1x1xf32>
    %15 = vector.broadcast %14 : vector<4x1x1xf32> to vector<4x16x16xf32>
    %16 = arith.mulf %12, %15 : vector<4x16x16xf32>
    %17 = arith.addf %11, %16 : vector<4x16x16xf32>
    %18 = vector.extract_strided_slice %5 {offsets = [0, 0, 2], sizes = [4, 16, 16], strides = [1, 1, 1]} : vector<4x18x18xf32> to vector<4x16x16xf32>
    %19 = vector.extract_strided_slice %6 {offsets = [0, 2], sizes = [4, 1], strides = [1, 1]} : vector<4x9xf32> to vector<4x1xf32>
    %20 = vector.shape_cast %19 : vector<4x1xf32> to vector<4x1x1xf32>
    %21 = vector.broadcast %20 : vector<4x1x1xf32> to vector<4x16x16xf32>
    %22 = arith.mulf %18, %21 : vector<4x16x16xf32>
    %23 = arith.addf %17, %22 : vector<4x16x16xf32>
    %24 = vector.extract_strided_slice %5 {offsets = [0, 1, 0], sizes = [4, 16, 16], strides = [1, 1, 1]} : vector<4x18x18xf32> to vector<4x16x16xf32>
    %25 = vector.extract_strided_slice %6 {offsets = [0, 3], sizes = [4, 1], strides = [1, 1]} : vector<4x9xf32> to vector<4x1xf32>
    %26 = vector.shape_cast %25 : vector<4x1xf32> to vector<4x1x1xf32>
    %27 = vector.broadcast %26 : vector<4x1x1xf32> to vector<4x16x16xf32>
    %28 = arith.mulf %24, %27 : vector<4x16x16xf32>
    %29 = arith.addf %23, %28 : vector<4x16x16xf32>
    %30 = vector.extract_strided_slice %5 {offsets = [0, 1, 1], sizes = [4, 16, 16], strides = [1, 1, 1]} : vector<4x18x18xf32> to vector<4x16x16xf32>
    %31 = vector.extract_strided_slice %6 {offsets = [0, 4], sizes = [4, 1], strides = [1, 1]} : vector<4x9xf32> to vector<4x1xf32>
    %32 = vector.shape_cast %31 : vector<4x1xf32> to vector<4x1x1xf32>
    %33 = vector.broadcast %32 : vector<4x1x1xf32> to vector<4x16x16xf32>
    %34 = arith.mulf %30, %33 : vector<4x16x16xf32>
    %35 = arith.addf %29, %34 : vector<4x16x16xf32>
    %36 = vector.extract_strided_slice %5 {offsets = [0, 1, 2], sizes = [4, 16, 16], strides = [1, 1, 1]} : vector<4x18x18xf32> to vector<4x16x16xf32>
    %37 = vector.extract_strided_slice %6 {offsets = [0, 5], sizes = [4, 1], strides = [1, 1]} : vector<4x9xf32> to vector<4x1xf32>
    %38 = vector.shape_cast %37 : vector<4x1xf32> to vector<4x1x1xf32>
    %39 = vector.broadcast %38 : vector<4x1x1xf32> to vector<4x16x16xf32>
    %40 = arith.mulf %36, %39 : vector<4x16x16xf32>
    %41 = arith.addf %35, %40 : vector<4x16x16xf32>
    %42 = vector.extract_strided_slice %5 {offsets = [0, 2, 0], sizes = [4, 16, 16], strides = [1, 1, 1]} : vector<4x18x18xf32> to vector<4x16x16xf32>
    %43 = vector.extract_strided_slice %6 {offsets = [0, 6], sizes = [4, 1], strides = [1, 1]} : vector<4x9xf32> to vector<4x1xf32>
    %44 = vector.shape_cast %43 : vector<4x1xf32> to vector<4x1x1xf32>
    %45 = vector.broadcast %44 : vector<4x1x1xf32> to vector<4x16x16xf32>
    %46 = arith.mulf %42, %45 : vector<4x16x16xf32>
    %47 = arith.addf %41, %46 : vector<4x16x16xf32>
    %48 = vector.extract_strided_slice %5 {offsets = [0, 2, 1], sizes = [4, 16, 16], strides = [1, 1, 1]} : vector<4x18x18xf32> to vector<4x16x16xf32>
    %49 = vector.extract_strided_slice %6 {offsets = [0, 7], sizes = [4, 1], strides = [1, 1]} : vector<4x9xf32> to vector<4x1xf32>
    %50 = vector.shape_cast %49 : vector<4x1xf32> to vector<4x1x1xf32>
    %51 = vector.broadcast %50 : vector<4x1x1xf32> to vector<4x16x16xf32>
    %52 = arith.mulf %48, %51 : vector<4x16x16xf32>
    %53 = arith.addf %47, %52 : vector<4x16x16xf32>
    %54 = vector.extract_strided_slice %5 {offsets = [0, 2, 2], sizes = [4, 16, 16], strides = [1, 1, 1]} : vector<4x18x18xf32> to vector<4x16x16xf32>
    %55 = vector.extract_strided_slice %6 {offsets = [0, 8], sizes = [4, 1], strides = [1, 1]} : vector<4x9xf32> to vector<4x1xf32>
    %56 = vector.shape_cast %55 : vector<4x1xf32> to vector<4x1x1xf32>
    %57 = vector.broadcast %56 : vector<4x1x1xf32> to vector<4x16x16xf32>
    %58 = arith.mulf %54, %57 : vector<4x16x16xf32>
    %59 = arith.addf %53, %58 : vector<4x16x16xf32>
    %60 = vector.shape_cast %59 : vector<4x16x16xf32> to vector<4x256xf32>
    %c0_13 = arith.constant 0 : index
    %c0_14 = arith.constant 0 : index
    %c0_15 = arith.constant 0 : index
    %61 = vector.load %arg3[%c0_13, %c0_14, %c0_15] : memref<1x4x256xf32, #tpu.memory_space<vmem>>, vector<1x4x256xf32>
    %62 = vector.shape_cast %61 : vector<1x4x256xf32> to vector<4x256xf32>
    %63 = vector.shape_cast %60 : vector<4x256xf32> to vector<1x4x256xf32>
    tpu.vector_store %arg3[%c0_13, %c0_14, %c0_15], %63 {strides = array<i32>} : memref<1x4x256xf32, #tpu.memory_space<vmem>>, vector<1x4x256xf32>,
    %cst_16 = arith.constant dense<0.000000e+00> : vector<4xf32>
    %64 = vector.multi_reduction <add>, %60, %cst_16 [1] : vector<4x256xf32> to vector<4xf32>
    %65 = vector.shape_cast %64 : vector<4xf32> to vector<4x1xf32>
    %c0_17 = arith.constant 0 : index
    %c0_18 = arith.constant 0 : index
    %c0_19 = arith.constant 0 : index
    %66 = vector.load %arg4[%c0_17, %c0_18, %c0_19] : memref<1x4x1xf32, #tpu.memory_space<vmem>>, vector<1x4x1xf32>
    %67 = vector.shape_cast %66 : vector<1x4x1xf32> to vector<4x1xf32>
    %68 = vector.shape_cast %65 : vector<4x1xf32> to vector<1x4x1xf32>
    tpu.vector_store %arg4[%c0_17, %c0_18, %c0_19], %68 {strides = array<i32>} : memref<1x4x1xf32, #tpu.memory_space<vmem>>, vector<1x4x1xf32>,
    %69 = arith.mulf %60, %60 : vector<4x256xf32>
    %cst_20 = arith.constant dense<0.000000e+00> : vector<4xf32>
    %70 = vector.multi_reduction <add>, %69, %cst_20 [1] : vector<4x256xf32> to vector<4xf32>
    %71 = vector.shape_cast %70 : vector<4xf32> to vector<4x1xf32>
    %c0_21 = arith.constant 0 : index
    %c0_22 = arith.constant 0 : index
    %c0_23 = arith.constant 0 : index
    %72 = vector.load %arg5[%c0_21, %c0_22, %c0_23] : memref<1x4x1xf32, #tpu.memory_space<vmem>>, vector<1x4x1xf32>
    %73 = vector.shape_cast %72 : vector<1x4x1xf32> to vector<4x1xf32>
    %74 = vector.shape_cast %71 : vector<4x1xf32> to vector<1x4x1xf32>
    tpu.vector_store %arg5[%c0_21, %c0_22, %c0_23], %74 {strides = array<i32>} : memref<1x4x1xf32, #tpu.memory_space<vmem>>, vector<1x4x1xf32>,
    return
  }
  func.func @transform_0(%arg0: i32) -> (i32, i32, i32, i32) {
    %c0_i32 = arith.constant 0 : i32
    %c0_i32_0 = arith.constant 0 : i32
    %c0_i32_1 = arith.constant 0 : i32
    %c0_i32_2 = arith.constant 0 : i32
    return %arg0, %c0_i32, %c0_i32_0, %c0_i32_1 : i32, i32, i32, i32
  }
  func.func @transform_1(%arg0: i32) -> (i32, i32) {
    %c0_i32 = arith.constant 0 : i32
    %c0_i32_0 = arith.constant 0 : i32
    %c0_i32_1 = arith.constant 0 : i32
    return %c0_i32, %c0_i32_0 : i32, i32
  }
  func.func @transform_2(%arg0: i32) -> (i32, i32, i32) {
    %c0_i32 = arith.constant 0 : i32
    %c0_i32_0 = arith.constant 0 : i32
    %c0_i32_1 = arith.constant 0 : i32
    return %arg0, %c0_i32, %c0_i32_0 : i32, i32, i32
  }
  func.func @transform_3(%arg0: i32) -> (i32, i32, i32) {
    %c0_i32 = arith.constant 0 : i32
    %c0_i32_0 = arith.constant 0 : i32
    %c0_i32_1 = arith.constant 0 : i32
    return %arg0, %c0_i32, %c0_i32_0 : i32, i32, i32
  }
  func.func @transform_4(%arg0: i32) -> (i32, i32, i32) {
    %c0_i32 = arith.constant 0 : i32
    %c0_i32_0 = arith.constant 0 : i32
    %c0_i32_1 = arith.constant 0 : i32
    return %arg0, %c0_i32, %c0_i32_0 : i32, i32, i32
  }
}

module attributes {stable_mosaic.version = 11 : i64} {
  func.func @_bn1_pw_stats_kernel(%arg0: i32, %arg1: i32, %arg2: memref<1x4x256xf32, #tpu.memory_space<vmem>>, %arg3: memref<4x1xf32, #tpu.memory_space<vmem>>, %arg4: memref<4x1xf32, #tpu.memory_space<vmem>>, %arg5: memref<8x4xf32, #tpu.memory_space<vmem>>, %arg6: memref<1x8x1xf32, #tpu.memory_space<vmem>>, %arg7: memref<1x8x1xf32, #tpu.memory_space<vmem>>) attributes {dimension_semantics = [#tpu.dimension_semantics<parallel>, #tpu.dimension_semantics<parallel>], iteration_bounds = array<i64: 2, 1>, scalar_prefetch = 0 : i64, scratch_operands = 0 : i64, tpu.core_type = #tpu.core_type<tc>, window_params = [{transform_indices = @transform_0, window_bounds = array<i64: 1, 4, 256>}, {pipeline_mode = #tpu.pipeline_mode<synchronous>, transform_indices = @transform_1, window_bounds = array<i64: 4, 1>}, {pipeline_mode = #tpu.pipeline_mode<synchronous>, transform_indices = @transform_2, window_bounds = array<i64: 4, 1>}, {pipeline_mode = #tpu.pipeline_mode<synchronous>, transform_indices = @transform_3, window_bounds = array<i64: 8, 4>}, {transform_indices = @transform_4, window_bounds = array<i64: 1, 8, 1>}, {transform_indices = @transform_5, window_bounds = array<i64: 1, 8, 1>}]} {
    %c0 = arith.constant 0 : index
    %c0_0 = arith.constant 0 : index
    %c0_1 = arith.constant 0 : index
    %0 = vector.load %arg2[%c0, %c0_0, %c0_1] : memref<1x4x256xf32, #tpu.memory_space<vmem>>, vector<1x4x256xf32>
    %1 = vector.shape_cast %0 : vector<1x4x256xf32> to vector<4x256xf32>
    %c0_2 = arith.constant 0 : index
    %c0_3 = arith.constant 0 : index
    %2 = vector.load %arg3[%c0_2, %c0_3] : memref<4x1xf32, #tpu.memory_space<vmem>>, vector<4x1xf32>
    %3 = vector.broadcast %2 : vector<4x1xf32> to vector<4x256xf32>
    %4 = arith.mulf %1, %3 : vector<4x256xf32>
    %c0_4 = arith.constant 0 : index
    %c0_5 = arith.constant 0 : index
    %5 = vector.load %arg4[%c0_4, %c0_5] : memref<4x1xf32, #tpu.memory_space<vmem>>, vector<4x1xf32>
    %6 = vector.broadcast %5 : vector<4x1xf32> to vector<4x256xf32>
    %7 = arith.addf %4, %6 : vector<4x256xf32>
    %cst = arith.constant 0.000000e+00 : f32
    %8 = vector.broadcast %cst : f32 to vector<4x256xf32>
    %9 = arith.cmpf ogt, %7, %8 : vector<4x256xf32>
    %cst_6 = arith.constant 0.00999999977 : f32
    %10 = vector.broadcast %cst_6 : f32 to vector<4x256xf32>
    %11 = arith.mulf %10, %7 : vector<4x256xf32>
    %12 = arith.select %9, %7, %11 : vector<4x256xi1>, vector<4x256xf32>
    %c0_7 = arith.constant 0 : index
    %c0_8 = arith.constant 0 : index
    %13 = vector.load %arg5[%c0_7, %c0_8] : memref<8x4xf32, #tpu.memory_space<vmem>>, vector<8x4xf32>
    %14 = vector.extract_strided_slice %13 {offsets = [0, 0], sizes = [8, 1], strides = [1, 1]} : vector<8x4xf32> to vector<8x1xf32>
    %15 = vector.extract_strided_slice %12 {offsets = [0, 0], sizes = [1, 256], strides = [1, 1]} : vector<4x256xf32> to vector<1x256xf32>
    %16 = vector.broadcast %14 : vector<8x1xf32> to vector<8x256xf32>
    %17 = vector.broadcast %15 : vector<1x256xf32> to vector<8x256xf32>
    %18 = arith.mulf %16, %17 : vector<8x256xf32>
    %19 = vector.extract_strided_slice %13 {offsets = [0, 1], sizes = [8, 1], strides = [1, 1]} : vector<8x4xf32> to vector<8x1xf32>
    %20 = vector.extract_strided_slice %12 {offsets = [1, 0], sizes = [1, 256], strides = [1, 1]} : vector<4x256xf32> to vector<1x256xf32>
    %21 = vector.broadcast %19 : vector<8x1xf32> to vector<8x256xf32>
    %22 = vector.broadcast %20 : vector<1x256xf32> to vector<8x256xf32>
    %23 = arith.mulf %21, %22 : vector<8x256xf32>
    %24 = arith.addf %18, %23 : vector<8x256xf32>
    %25 = vector.extract_strided_slice %13 {offsets = [0, 2], sizes = [8, 1], strides = [1, 1]} : vector<8x4xf32> to vector<8x1xf32>
    %26 = vector.extract_strided_slice %12 {offsets = [2, 0], sizes = [1, 256], strides = [1, 1]} : vector<4x256xf32> to vector<1x256xf32>
    %27 = vector.broadcast %25 : vector<8x1xf32> to vector<8x256xf32>
    %28 = vector.broadcast %26 : vector<1x256xf32> to vector<8x256xf32>
    %29 = arith.mulf %27, %28 : vector<8x256xf32>
    %30 = arith.addf %24, %29 : vector<8x256xf32>
    %31 = vector.extract_strided_slice %13 {offsets = [0, 3], sizes = [8, 1], strides = [1, 1]} : vector<8x4xf32> to vector<8x1xf32>
    %32 = vector.extract_strided_slice %12 {offsets = [3, 0], sizes = [1, 256], strides = [1, 1]} : vector<4x256xf32> to vector<1x256xf32>
    %33 = vector.broadcast %31 : vector<8x1xf32> to vector<8x256xf32>
    %34 = vector.broadcast %32 : vector<1x256xf32> to vector<8x256xf32>
    %35 = arith.mulf %33, %34 : vector<8x256xf32>
    %36 = arith.addf %30, %35 : vector<8x256xf32>
    %cst_9 = arith.constant dense<0.000000e+00> : vector<8xf32>
    %37 = vector.multi_reduction <add>, %36, %cst_9 [1] : vector<8x256xf32> to vector<8xf32>
    %38 = vector.shape_cast %37 : vector<8xf32> to vector<8x1xf32>
    %c0_10 = arith.constant 0 : index
    %c0_11 = arith.constant 0 : index
    %c0_12 = arith.constant 0 : index
    %39 = vector.load %arg6[%c0_10, %c0_11, %c0_12] : memref<1x8x1xf32, #tpu.memory_space<vmem>>, vector<1x8x1xf32>
    %40 = vector.shape_cast %39 : vector<1x8x1xf32> to vector<8x1xf32>
    %41 = vector.shape_cast %38 : vector<8x1xf32> to vector<1x8x1xf32>
    tpu.vector_store %arg6[%c0_10, %c0_11, %c0_12], %41 {strides = array<i32>} : memref<1x8x1xf32, #tpu.memory_space<vmem>>, vector<1x8x1xf32>,
    %42 = arith.mulf %36, %36 : vector<8x256xf32>
    %cst_13 = arith.constant dense<0.000000e+00> : vector<8xf32>
    %43 = vector.multi_reduction <add>, %42, %cst_13 [1] : vector<8x256xf32> to vector<8xf32>
    %44 = vector.shape_cast %43 : vector<8xf32> to vector<8x1xf32>
    %c0_14 = arith.constant 0 : index
    %c0_15 = arith.constant 0 : index
    %c0_16 = arith.constant 0 : index
    %45 = vector.load %arg7[%c0_14, %c0_15, %c0_16] : memref<1x8x1xf32, #tpu.memory_space<vmem>>, vector<1x8x1xf32>
    %46 = vector.shape_cast %45 : vector<1x8x1xf32> to vector<8x1xf32>
    %47 = vector.shape_cast %44 : vector<8x1xf32> to vector<1x8x1xf32>
    tpu.vector_store %arg7[%c0_14, %c0_15, %c0_16], %47 {strides = array<i32>} : memref<1x8x1xf32, #tpu.memory_space<vmem>>, vector<1x8x1xf32>,
    return
  }
  func.func @transform_0(%arg0: i32, %arg1: i32) -> (i32, i32, i32) {
    %c0_i32 = arith.constant 0 : i32
    %c0_i32_0 = arith.constant 0 : i32
    return %arg0, %c0_i32, %arg1 : i32, i32, i32
  }
  func.func @transform_1(%arg0: i32, %arg1: i32) -> (i32, i32) {
    %c0_i32 = arith.constant 0 : i32
    %c0_i32_0 = arith.constant 0 : i32
    %c0_i32_1 = arith.constant 0 : i32
    return %c0_i32, %c0_i32_0 : i32, i32
  }
  func.func @transform_2(%arg0: i32, %arg1: i32) -> (i32, i32) {
    %c0_i32 = arith.constant 0 : i32
    %c0_i32_0 = arith.constant 0 : i32
    %c0_i32_1 = arith.constant 0 : i32
    return %c0_i32, %c0_i32_0 : i32, i32
  }
  func.func @transform_3(%arg0: i32, %arg1: i32) -> (i32, i32) {
    %c0_i32 = arith.constant 0 : i32
    %c0_i32_0 = arith.constant 0 : i32
    %c0_i32_1 = arith.constant 0 : i32
    return %c0_i32, %c0_i32_0 : i32, i32
  }
  func.func @transform_4(%arg0: i32, %arg1: i32) -> (i32, i32, i32) {
    %c1_i32 = arith.constant 1 : i32
    %0 = arith.muli %arg0, %c1_i32 : i32
    %1 = arith.addi %0, %arg1 : i32
    %c0_i32 = arith.constant 0 : i32
    %c0_i32_0 = arith.constant 0 : i32
    %c0_i32_1 = arith.constant 0 : i32
    return %1, %c0_i32, %c0_i32_0 : i32, i32, i32
  }
  func.func @transform_5(%arg0: i32, %arg1: i32) -> (i32, i32, i32) {
    %c1_i32 = arith.constant 1 : i32
    %0 = arith.muli %arg0, %c1_i32 : i32
    %1 = arith.addi %0, %arg1 : i32
    %c0_i32 = arith.constant 0 : i32
    %c0_i32_0 = arith.constant 0 : i32
    %c0_i32_1 = arith.constant 0 : i32
    return %1, %c0_i32, %c0_i32_0 : i32, i32, i32
  }
}

module attributes {stable_mosaic.version = 11 : i64} {
  func.func @_bn2_out_kernel(%arg0: i32, %arg1: i32, %arg2: memref<1x4x256xf32, #tpu.memory_space<vmem>>, %arg3: memref<4x1xf32, #tpu.memory_space<vmem>>, %arg4: memref<4x1xf32, #tpu.memory_space<vmem>>, %arg5: memref<8x4xf32, #tpu.memory_space<vmem>>, %arg6: memref<8x1xf32, #tpu.memory_space<vmem>>, %arg7: memref<8x1xf32, #tpu.memory_space<vmem>>, %arg8: memref<1x8x256xf32, #tpu.memory_space<vmem>>) attributes {dimension_semantics = [#tpu.dimension_semantics<parallel>, #tpu.dimension_semantics<parallel>], iteration_bounds = array<i64: 2, 1>, scalar_prefetch = 0 : i64, scratch_operands = 0 : i64, tpu.core_type = #tpu.core_type<tc>, window_params = [{transform_indices = @transform_0, window_bounds = array<i64: 1, 4, 256>}, {pipeline_mode = #tpu.pipeline_mode<synchronous>, transform_indices = @transform_1, window_bounds = array<i64: 4, 1>}, {pipeline_mode = #tpu.pipeline_mode<synchronous>, transform_indices = @transform_2, window_bounds = array<i64: 4, 1>}, {pipeline_mode = #tpu.pipeline_mode<synchronous>, transform_indices = @transform_3, window_bounds = array<i64: 8, 4>}, {pipeline_mode = #tpu.pipeline_mode<synchronous>, transform_indices = @transform_4, window_bounds = array<i64: 8, 1>}, {pipeline_mode = #tpu.pipeline_mode<synchronous>, transform_indices = @transform_5, window_bounds = array<i64: 8, 1>}, {transform_indices = @transform_6, window_bounds = array<i64: 1, 8, 256>}]} {
    %c0 = arith.constant 0 : index
    %c0_0 = arith.constant 0 : index
    %c0_1 = arith.constant 0 : index
    %0 = vector.load %arg2[%c0, %c0_0, %c0_1] : memref<1x4x256xf32, #tpu.memory_space<vmem>>, vector<1x4x256xf32>
    %1 = vector.shape_cast %0 : vector<1x4x256xf32> to vector<4x256xf32>
    %c0_2 = arith.constant 0 : index
    %c0_3 = arith.constant 0 : index
    %2 = vector.load %arg3[%c0_2, %c0_3] : memref<4x1xf32, #tpu.memory_space<vmem>>, vector<4x1xf32>
    %3 = vector.broadcast %2 : vector<4x1xf32> to vector<4x256xf32>
    %4 = arith.mulf %1, %3 : vector<4x256xf32>
    %c0_4 = arith.constant 0 : index
    %c0_5 = arith.constant 0 : index
    %5 = vector.load %arg4[%c0_4, %c0_5] : memref<4x1xf32, #tpu.memory_space<vmem>>, vector<4x1xf32>
    %6 = vector.broadcast %5 : vector<4x1xf32> to vector<4x256xf32>
    %7 = arith.addf %4, %6 : vector<4x256xf32>
    %cst = arith.constant 0.000000e+00 : f32
    %8 = vector.broadcast %cst : f32 to vector<4x256xf32>
    %9 = arith.cmpf ogt, %7, %8 : vector<4x256xf32>
    %cst_6 = arith.constant 0.00999999977 : f32
    %10 = vector.broadcast %cst_6 : f32 to vector<4x256xf32>
    %11 = arith.mulf %10, %7 : vector<4x256xf32>
    %12 = arith.select %9, %7, %11 : vector<4x256xi1>, vector<4x256xf32>
    %c0_7 = arith.constant 0 : index
    %c0_8 = arith.constant 0 : index
    %13 = vector.load %arg5[%c0_7, %c0_8] : memref<8x4xf32, #tpu.memory_space<vmem>>, vector<8x4xf32>
    %14 = vector.extract_strided_slice %13 {offsets = [0, 0], sizes = [8, 1], strides = [1, 1]} : vector<8x4xf32> to vector<8x1xf32>
    %15 = vector.extract_strided_slice %12 {offsets = [0, 0], sizes = [1, 256], strides = [1, 1]} : vector<4x256xf32> to vector<1x256xf32>
    %16 = vector.broadcast %14 : vector<8x1xf32> to vector<8x256xf32>
    %17 = vector.broadcast %15 : vector<1x256xf32> to vector<8x256xf32>
    %18 = arith.mulf %16, %17 : vector<8x256xf32>
    %19 = vector.extract_strided_slice %13 {offsets = [0, 1], sizes = [8, 1], strides = [1, 1]} : vector<8x4xf32> to vector<8x1xf32>
    %20 = vector.extract_strided_slice %12 {offsets = [1, 0], sizes = [1, 256], strides = [1, 1]} : vector<4x256xf32> to vector<1x256xf32>
    %21 = vector.broadcast %19 : vector<8x1xf32> to vector<8x256xf32>
    %22 = vector.broadcast %20 : vector<1x256xf32> to vector<8x256xf32>
    %23 = arith.mulf %21, %22 : vector<8x256xf32>
    %24 = arith.addf %18, %23 : vector<8x256xf32>
    %25 = vector.extract_strided_slice %13 {offsets = [0, 2], sizes = [8, 1], strides = [1, 1]} : vector<8x4xf32> to vector<8x1xf32>
    %26 = vector.extract_strided_slice %12 {offsets = [2, 0], sizes = [1, 256], strides = [1, 1]} : vector<4x256xf32> to vector<1x256xf32>
    %27 = vector.broadcast %25 : vector<8x1xf32> to vector<8x256xf32>
    %28 = vector.broadcast %26 : vector<1x256xf32> to vector<8x256xf32>
    %29 = arith.mulf %27, %28 : vector<8x256xf32>
    %30 = arith.addf %24, %29 : vector<8x256xf32>
    %31 = vector.extract_strided_slice %13 {offsets = [0, 3], sizes = [8, 1], strides = [1, 1]} : vector<8x4xf32> to vector<8x1xf32>
    %32 = vector.extract_strided_slice %12 {offsets = [3, 0], sizes = [1, 256], strides = [1, 1]} : vector<4x256xf32> to vector<1x256xf32>
    %33 = vector.broadcast %31 : vector<8x1xf32> to vector<8x256xf32>
    %34 = vector.broadcast %32 : vector<1x256xf32> to vector<8x256xf32>
    %35 = arith.mulf %33, %34 : vector<8x256xf32>
    %36 = arith.addf %30, %35 : vector<8x256xf32>
    %c0_9 = arith.constant 0 : index
    %c0_10 = arith.constant 0 : index
    %37 = vector.load %arg6[%c0_9, %c0_10] : memref<8x1xf32, #tpu.memory_space<vmem>>, vector<8x1xf32>
    %38 = vector.broadcast %37 : vector<8x1xf32> to vector<8x256xf32>
    %39 = arith.mulf %36, %38 : vector<8x256xf32>
    %c0_11 = arith.constant 0 : index
    %c0_12 = arith.constant 0 : index
    %40 = vector.load %arg7[%c0_11, %c0_12] : memref<8x1xf32, #tpu.memory_space<vmem>>, vector<8x1xf32>
    %41 = vector.broadcast %40 : vector<8x1xf32> to vector<8x256xf32>
    %42 = arith.addf %39, %41 : vector<8x256xf32>
    %cst_13 = arith.constant 0.000000e+00 : f32
    %43 = vector.broadcast %cst_13 : f32 to vector<8x256xf32>
    %44 = arith.cmpf ogt, %42, %43 : vector<8x256xf32>
    %cst_14 = arith.constant 0.00999999977 : f32
    %45 = vector.broadcast %cst_14 : f32 to vector<8x256xf32>
    %46 = arith.mulf %45, %42 : vector<8x256xf32>
    %47 = arith.select %44, %42, %46 : vector<8x256xi1>, vector<8x256xf32>
    %c0_15 = arith.constant 0 : index
    %c0_16 = arith.constant 0 : index
    %c0_17 = arith.constant 0 : index
    %48 = vector.load %arg8[%c0_15, %c0_16, %c0_17] : memref<1x8x256xf32, #tpu.memory_space<vmem>>, vector<1x8x256xf32>
    %49 = vector.shape_cast %48 : vector<1x8x256xf32> to vector<8x256xf32>
    %50 = vector.shape_cast %47 : vector<8x256xf32> to vector<1x8x256xf32>
    tpu.vector_store %arg8[%c0_15, %c0_16, %c0_17], %50 {strides = array<i32>} : memref<1x8x256xf32, #tpu.memory_space<vmem>>, vector<1x8x256xf32>,
    return
  }
  func.func @transform_0(%arg0: i32, %arg1: i32) -> (i32, i32, i32) {
    %c0_i32 = arith.constant 0 : i32
    %c0_i32_0 = arith.constant 0 : i32
    return %arg0, %c0_i32, %arg1 : i32, i32, i32
  }
  func.func @transform_1(%arg0: i32, %arg1: i32) -> (i32, i32) {
    %c0_i32 = arith.constant 0 : i32
    %c0_i32_0 = arith.constant 0 : i32
    %c0_i32_1 = arith.constant 0 : i32
    return %c0_i32, %c0_i32_0 : i32, i32
  }
  func.func @transform_2(%arg0: i32, %arg1: i32) -> (i32, i32) {
    %c0_i32 = arith.constant 0 : i32
    %c0_i32_0 = arith.constant 0 : i32
    %c0_i32_1 = arith.constant 0 : i32
    return %c0_i32, %c0_i32_0 : i32, i32
  }
  func.func @transform_3(%arg0: i32, %arg1: i32) -> (i32, i32) {
    %c0_i32 = arith.constant 0 : i32
    %c0_i32_0 = arith.constant 0 : i32
    %c0_i32_1 = arith.constant 0 : i32
    return %c0_i32, %c0_i32_0 : i32, i32
  }
  func.func @transform_4(%arg0: i32, %arg1: i32) -> (i32, i32) {
    %c0_i32 = arith.constant 0 : i32
    %c0_i32_0 = arith.constant 0 : i32
    %c0_i32_1 = arith.constant 0 : i32
    return %c0_i32, %c0_i32_0 : i32, i32
  }
  func.func @transform_5(%arg0: i32, %arg1: i32) -> (i32, i32) {
    %c0_i32 = arith.constant 0 : i32
    %c0_i32_0 = arith.constant 0 : i32
    %c0_i32_1 = arith.constant 0 : i32
    return %c0_i32, %c0_i32_0 : i32, i32
  }
  func.func @transform_6(%arg0: i32, %arg1: i32) -> (i32, i32, i32) {
    %c0_i32 = arith.constant 0 : i32
    %c0_i32_0 = arith.constant 0 : i32
    return %arg0, %c0_i32, %arg1 : i32, i32, i32
  }
}

</mosaic_0001>

<llo_original>
// kernel: conv_dw_block.4
$region0: #{conv_dw_block.4}
  #allocation0 [shape = 'u32[]', space=smem, size = 0x4, offset = 0x4, fixed_abs, tag = 'smem constant byte address 0x4 - core index']
  #allocation1 [shape = 'u32[144,128]{1,0:T(1,128)}', space=vmem, size = 0x12000, scoped, tag = 'internal scratch']
  %s0 = inlined_call_operand.vmem [shape: f32[2,4,256], index: 0, kind: input, shape index: {}]
  %s1 = inlined_call_operand.vmem [shape: f32[4,1], index: 1, kind: input, shape index: {}]
  %s2 = inlined_call_operand.vmem [shape: f32[4,1], index: 2, kind: input, shape index: {}]
  %s3 = inlined_call_operand.vmem [shape: f32[8,4], index: 3, kind: input, shape index: {}]
  %s4 = inlined_call_operand.vmem [shape: f32[2,8,1], index: 4, kind: output, shape index: {0}]
  %s5 = inlined_call_operand.vmem [shape: f32[2,8,1], index: 5, kind: output, shape index: {1}]
  %6 = xla_tuple %s4, %s5
  %s7 = sld [smem:[#allocation0]]
  $region57: #{conv_dw_block.4} parent=0
    _
  %s9 = ssub.s32 1, %s7
  %s10 = scalar_select 0, %s9, %s7
  loop: start=0, step=1, limit=4
  $region2: #{conv_dw_block.4} parent=0 // loop_pre_header
    _
  $region3: #{conv_dw_block.4} parent=0 // loop_header
    %s12 = sphi 0, %s16
    %p13 = scmp.ge.s32.totalorder %s12, 4
    %s19 = sphi 0, %s31
    %s20 = sphi 0, %s27
    %s21 = sphi 0, %s19
    %s22 = sphi 0, %s20
    %s23 = sphi 0, %s21
    %s24 = sphi 0, %s22
    %s36 = sphi 0, %s38
    %s39 = sphi 0, %s36
    %s40 = sphi 0, %s39
    %s56 = sphi 0, %s40
    %s60 = sphi 0, %s60
    %s62 = sphi 0, %s60
    %s63 = sphi 0, %s62
    %s77 = sphi 0, %s63
    %s81 = sphi 0, %s81
    %s83 = sphi 0, %s81
    %s84 = sphi 0, %s83
    %s98 = sphi 0, %s84
    %s102 = sphi 0, %s102
    %s104 = sphi 0, %s102
    %s105 = sphi 0, %s104
    %s119 = sphi 0, %s105
    %s127 = sphi 0, %s129
    %s130 = sphi 0, %s127
    %s131 = sphi 0, %s130
    %s147 = sphi 0, %s131
    %s155 = sphi 0, %s157
    %s158 = sphi 0, %s155
    %s159 = sphi 0, %s158
    %s175 = sphi 0, %s159
  $region4: #{conv_dw_block.4} parent=0 // loop_header_branch
    %15 = sbr.rel (%p13) target = $region8
  $region5: #{conv_dw_block.4} parent=0 // loop_body
    %s17 = ssub.s32 %s12, 1
    %s18 = ssub.s32 %s12, 2
    %s25 = sadd.s32 1, %s20
    %p26 = scmp.ge.s32.totalorder %s25, 1
    %s27 = scalar_select %p26, 0, %s25
    %s28 = sadd.s32 1, %s19
    %s29 = scalar_select %p26, %s28, %s19
    %p30 = scmp.ge.s32.totalorder %s29, 2
    %s31 = scalar_select %p30, 0, %s29
    %s32 = ssub.s32 %s19, %s31
    %s33 = ssub.s32 %s20, %s27
    %s34 = sor.u32 %s32, %s33
    %p35 = scmp.eq.s32.totalorder %s34, 0
    %s37 = sadd.s32 %s36, 1
    %s38 = scalar_select %p35, %s36, %s37
    %p41 = pneg %p35
    %p42 = scmp.eq.s32.totalorder %s12, 1
    %p43 = por %p41, %p42
    %p44 = scmp.ne.s32.totalorder %s36, %s39
    %p45 = scmp.eq.s32.totalorder %s12, 0
    %p46 = por %p44, %p45
    %p47 = scmp.ne.s32.totalorder %s36, %s39
    %p48 = scmp.eq.s32.totalorder %s17, 1
    %p49 = por %p47, %p48
    %p50 = scmp.ne.s32.totalorder %s39, %s40
    %p51 = scmp.eq.s32.totalorder %s17, 0
    %p52 = por %p50, %p51
    %p53 = scmp.ne.s32.totalorder %s39, %s40
    %p54 = scmp.eq.s32.totalorder %s18, 1
    %p55 = por %p53, %p54
    %p57 = scmp.ne.s32.totalorder %s40, %s56
    %p58 = scmp.eq.s32.totalorder %s18, 0
    %p59 = por %p57, %p58
    %s61 = sadd.s32 %s60, 1
    %p64 = scmp.eq.s32.totalorder %s12, 1
    %p65 = scmp.ne.s32.totalorder %s60, %s62
    %p66 = scmp.eq.s32.totalorder %s12, 0
    %p67 = por %p65, %p66
    %p68 = scmp.ne.s32.totalorder %s60, %s62
    %p69 = scmp.eq.s32.totalorder %s17, 1
    %p70 = por %p68, %p69
    %p71 = scmp.ne.s32.totalorder %s62, %s63
    %p72 = scmp.eq.s32.totalorder %s17, 0
    %p73 = por %p71, %p72
    %p74 = scmp.ne.s32.totalorder %s62, %s63
    %p75 = scmp.eq.s32.totalorder %s18, 1
    %p76 = por %p74, %p75
    %p78 = scmp.ne.s32.totalorder %s63, %s77
    %p79 = scmp.eq.s32.totalorder %s18, 0
    %p80 = por %p78, %p79
    %s82 = sadd.s32 %s81, 1
    %p85 = scmp.eq.s32.totalorder %s12, 1
    %p86 = scmp.ne.s32.totalorder %s81, %s83
    %p87 = scmp.eq.s32.totalorder %s12, 0
    %p88 = por %p86, %p87
    %p89 = scmp.ne.s32.totalorder %s81, %s83
    %p90 = scmp.eq.s32.totalorder %s17, 1
    %p91 = por %p89, %p90
    %p92 = scmp.ne.s32.totalorder %s83, %s84
    %p93 = scmp.eq.s32.totalorder %s17, 0
    %p94 = por %p92, %p93
    %p95 = scmp.ne.s32.totalorder %s83, %s84
    %p96 = scmp.eq.s32.totalorder %s18, 1
    %p97 = por %p95, %p96
    %p99 = scmp.ne.s32.totalorder %s84, %s98
    %p100 = scmp.eq.s32.totalorder %s18, 0
    %p101 = por %p99, %p100
    %s103 = sadd.s32 %s102, 1
    %p106 = scmp.eq.s32.totalorder %s12, 1
    %p107 = scmp.ne.s32.totalorder %s102, %s104
    %p108 = scmp.eq.s32.totalorder %s12, 0
    %p109 = por %p107, %p108
    %p110 = scmp.ne.s32.totalorder %s102, %s104
    %p111 = scmp.eq.s32.totalorder %s17, 1
    %p112 = por %p110, %p111
    %p113 = scmp.ne.s32.totalorder %s104, %s105
    %p114 = scmp.eq.s32.totalorder %s17, 0
    %p115 = por %p113, %p114
    %p116 = scmp.ne.s32.totalorder %s104, %s105
    %p117 = scmp.eq.s32.totalorder %s18, 1
    %p118 = por %p116, %p117
    %p120 = scmp.ne.s32.totalorder %s105, %s119
    %p121 = scmp.eq.s32.totalorder %s18, 0
    %p122 = por %p120, %p121
    %s123 = sadd.s32 %s19, %s20
    %s124 = sadd.s32 %s31, %s27
    %s125 = ssub.s32 %s123, %s124
    %p126 = scmp.eq.s32.totalorder %s125, 0
    %s128 = sadd.s32 %s127, 1
    %s129 = scalar_select %p126, %s127, %s128
    %p132 = pneg %p126
    %p133 = scmp.eq.s32.totalorder %s12, 1
    %p134 = por %p132, %p133
    %p135 = scmp.ne.s32.totalorder %s127, %s130
    %p136 = scmp.eq.s32.totalorder %s12, 0
    %p137 = por %p135, %p136
    %p138 = scmp.ne.s32.totalorder %s127, %s130
    %p139 = scmp.eq.s32.totalorder %s17, 1
    %p140 = por %p138, %p139
    %p141 = scmp.ne.s32.totalorder %s130, %s131
    %p142 = scmp.eq.s32.totalorder %s17, 0
    %p143 = por %p141, %p142
    %p144 = scmp.ne.s32.totalorder %s130, %s131
    %p145 = scmp.eq.s32.totalorder %s18, 1
    %p146 = por %p144, %p145
    %p148 = scmp.ne.s32.totalorder %s131, %s147
    %p149 = scmp.eq.s32.totalorder %s18, 0
    %p150 = por %p148, %p149
    %s151 = sadd.s32 %s19, %s20
    %s152 = sadd.s32 %s31, %s27
    %s153 = ssub.s32 %s151, %s152
    %p154 = scmp.eq.s32.totalorder %s153, 0
    %s156 = sadd.s32 %s155, 1
    %s157 = scalar_select %p154, %s155, %s156
    %p160 = pneg %p154
    %p161 = scmp.eq.s32.totalorder %s12, 1
    %p162 = por %p160, %p161
    %p163 = scmp.ne.s32.totalorder %s155, %s158
    %p164 = scmp.eq.s32.totalorder %s12, 0
    %p165 = por %p163, %p164
    %p166 = scmp.ne.s32.totalorder %s155, %s158
    %p167 = scmp.eq.s32.totalorder %s17, 1
    %p168 = por %p166, %p167
    %p169 = scmp.ne.s32.totalorder %s158, %s159
    %p170 = scmp.eq.s32.totalorder %s17, 0
    %p171 = por %p169, %p170
    %p172 = scmp.ne.s32.totalorder %s158, %s159
    %p173 = scmp.eq.s32.totalorder %s18, 1
    %p174 = por %p172, %p173
    %p176 = scmp.ne.s32.totalorder %s159, %s175
    %p177 = scmp.eq.s32.totalorder %s18, 0
    %p178 = por %p176, %p177
    %p179 = scmp.le.s32.totalorder 1, %s12
    %p180 = scmp.lt.s32.totalorder %s12, 3
    %p181 = pnand %p179, %p180
    %p182 = pneg %p181
    // Predicated region
    $region9: #{conv_dw_block.4} parent=5 // pred_check
      _
    $region10: #{conv_dw_block.4} parent=5 // pred_check_branch
      %184 = sbr.rel (%p181) target = $region12
    $region11: #{conv_dw_block.4} parent=5 // pred_region
      %s185 = ssub.s32 %s12, 1
      // Predicated region
      $region13: #{conv_dw_block.4} parent=11 // pred_check
        %p186 = pneg %p73
      $region14: #{conv_dw_block.4} parent=11 // pred_check_branch
        %188 = sbr.rel (%p186) target = $region16
      $region15: #{conv_dw_block.4} parent=11 // pred_region
        _
      $region16: #{conv_dw_block.4} parent=11 // pred_fallthru
        _
      // Predicated region
      $region17: #{conv_dw_block.4} parent=11 // pred_check
        %p189 = pneg %p94
      $region18: #{conv_dw_block.4} parent=11 // pred_check_branch
        %191 = sbr.rel (%p189) target = $region20
      $region19: #{conv_dw_block.4} parent=11 // pred_region
        _
      $region20: #{conv_dw_block.4} parent=11 // pred_fallthru
        _
      // Predicated region
      $region21: #{conv_dw_block.4} parent=11 // pred_check
        %p192 = pneg %p115
      $region22: #{conv_dw_block.4} parent=11 // pred_check_branch
        %194 = sbr.rel (%p192) target = $region24
      $region23: #{conv_dw_block.4} parent=11 // pred_region
        _
      $region24: #{conv_dw_block.4} parent=11 // pred_fallthru
        _
    $region12: #{conv_dw_block.4} parent=5 // pred_fallthru
      _
    %p195 = scmp.lt.s32.totalorder %s12, 2
    // Predicated region
    $region25: #{conv_dw_block.4} parent=5 // pred_check
      %p196 = pneg %p195
    $region26: #{conv_dw_block.4} parent=5 // pred_check_branch
      %198 = sbr.rel (%p196) target = $region28
    $region27: #{conv_dw_block.4} parent=5 // pred_region
      // Predicated region
      $region29: #{conv_dw_block.4} parent=27 // pred_check
        %p199 = pneg %p46
      $region30: #{conv_dw_block.4} parent=27 // pred_check_branch
        %201 = sbr.rel (%p199) target = $region32
      $region31: #{conv_dw_block.4} parent=27 // pred_region
        %s202 = smul.u32 2, %s20
        %p203 = scmp.lt.s32.totalorder %s19, 1
        %s204 = scalar_select %p203, %s19, 1
        %p205 = scmp.lt.s32.totalorder %s202, 1
        %s206 = scalar_select %p205, %s202, 1
        %s207 = smul.addr %s204, 2
        %s208 = sadd.s32 %s206, %s207
        %s209 = smul.addr %s208, 4
        %s210 = scalar_lea.vmem %s0, %s209
        %s211 = smul.u32 2, %s20
      $region32: #{conv_dw_block.4} parent=27 // pred_fallthru
        _
    $region28: #{conv_dw_block.4} parent=5 // pred_fallthru
      _
    %p212 = scmp.le.s32.totalorder 1, %s12
    %p213 = scmp.lt.s32.totalorder %s12, 3
    %p214 = pnand %p212, %p213
    %p215 = pneg %p214
    // Predicated region
    $region33: #{conv_dw_block.4} parent=5 // pred_check
      _
    $region34: #{conv_dw_block.4} parent=5 // pred_check_branch
      %217 = sbr.rel (%p214) target = $region36
    $region35: #{conv_dw_block.4} parent=5 // pred_region
      %s218 = ssub.s32 %s12, 1
      %s219 = smul.u32 2, %s22
      %p220 = scmp.lt.s32.totalorder %s21, 1
      %s221 = scalar_select %p220, %s21, 1
      %p222 = scmp.lt.s32.totalorder %s219, 1
      %s223 = scalar_select %p222, %s219, 1
      %s224 = smul.addr %s221, 2
      %s225 = sadd.s32 %s223, %s224
      %s226 = smul.addr %s225, 4
      %s227 = scalar_lea.vmem %s0, %s226
      %p228 = pneg %p52
      %p229 = pneg %p49
      %p230 = pneg %p73
      %p231 = pneg %p70
      %p232 = pneg %p94
      %p233 = pneg %p91
      %p234 = pneg %p115
      %p235 = pneg %p112
      %p236 = pneg %p143
      %p237 = pneg %p140
      %s238 = sadd.s32 %s21, %s22
      %p239 = scmp.lt.s32.totalorder %s238, 1
      %s240 = scalar_select %p239, %s238, 1
      %s241 = smul.addr %s240, 8
      %s242 = scalar_lea.vmem %s4, %s241
      %p243 = pneg %p171
      %p244 = pneg %p168
      %s245 = sadd.s32 %s21, %s22
      %p246 = scmp.lt.s32.totalorder %s245, 1
      %s247 = scalar_select %p246, %s245, 1
      %s248 = smul.addr %s247, 8
      %s249 = scalar_lea.vmem %s5, %s248
      %s250 = smul.u32 2, %s22
      %p251 = scmp.lt.s32.totalorder %s21, 1
      %s252 = scalar_select %p251, %s21, 1
      %p253 = scmp.lt.s32.totalorder %s250, 1
      %s254 = scalar_select %p253, %s250, 1
      %s255 = smul.addr %s252, 2
      %s256 = sadd.s32 %s254, %s255
      %s257 = smul.addr %s256, 4
      %s258 = scalar_lea.vmem %s0, %s257
      %s259 = smul.u32 2, %s22
      %s260 = sadd.s32 %s21, %s22
      %p261 = scmp.lt.s32.totalorder %s260, 1
      %s262 = scalar_select %p261, %s260, 1
      %s263 = smul.addr %s262, 8
      %s264 = scalar_lea.vmem %s4, %s263
      %s265 = sadd.s32 %s21, %s22
      %s266 = sadd.s32 %s21, %s22
      %p267 = scmp.lt.s32.totalorder %s266, 1
      %s268 = scalar_select %p267, %s266, 1
      %s269 = smul.addr %s268, 8
      %s270 = scalar_lea.vmem %s5, %s269
      %s271 = sadd.s32 %s21, %s22
      %v272 = vld [vmem:[%s258] sm:$0xff]
      %v273 = vld [vmem:[%s1] sm:$0xf]
      %275 = vset.pattern.permute.xlu0 0
      %276 = vperm.xlu0 %275, %v273
      %v277 = vpop.permute.xlu0 %276
      %v279 = vunpack.c.l.s4 839922192
      %v280 = vunpack.c.0.s8 %v279
      %v281 = vlaneseq
      %v282 = vshrl.u32 %v281, 7
      %v283 = vsub.s32 %v280, %v282
      %v284 = vrot.slane %v277, %v283
      %v286 = vmul.f32 %v272, %v284
      %v287 = vld [vmem:[%s2] sm:$0xf]
      %289 = vset.pattern.permute.xlu0 0
      %290 = vperm.xlu0 %289, %v287
      %v291 = vpop.permute.xlu0 %290
      %v293 = vunpack.c.l.s4 839922192
      %v294 = vunpack.c.0.s8 %v293
      %v295 = vlaneseq
      %v296 = vshrl.u32 %v295, 7
      %v297 = vsub.s32 %v294, %v296
      %v298 = vrot.slane %v291, %v297
      %v300 = vadd.f32 %v286, %v298
      %vm301 = vcmp.gt.f32.partialorder %v300, 0.0
      %v302 = vmul.f32 %v300, 0.01
      %v303 = vsel %vm301, %v300, %v302
      %v304 = vld [vmem:[%s3] sm:$0xff]
      %306 = vset.pattern.permute.xlu0 0
      %307 = vperm.xlu0 %306, %v304
      %v308 = vpop.permute.xlu0 %307
      %v311 = vlaneseq
      %v312 = vshrl.u32 %v311, 7
      %v313 = vsub.s32 0, %v312
      %v314 = vrot.slane %v303, %v313
      %v315 = vlaneseq
      %v316 = vshrl.u32 %v315, 7
      %v317 = vsub.s32 4, %v316
      %v318 = vrot.slane %v303, %v317
      %v321 = vlaneseq
      %v322 = vshrl.u32 %v321, 7
      %v323 = vsub.s32 0, %v322
      %v324 = vrot.slane %v314, %v323
      %v325 = vlaneseq
      %v326 = vshrl.u32 %v325, 7
      %v327 = vsub.s32 0, %v326
      %v328 = vrot.slane %v318, %v327
      %v329 = vmul.f32 %v308, %v324
      %v330 = vmul.f32 %v308, %v328
      %331 = vset.pattern.permute.xlu0 1
      %332 = vperm.xlu0 %331, %v304
      %v333 = vpop.permute.xlu0 %332
      %v335 = vlaneseq
      %v336 = vshrl.u32 %v335, 7
      %v337 = vsub.s32 1, %v336
      %v338 = vrot.slane %v303, %v337
      %v339 = vlaneseq
      %v340 = vshrl.u32 %v339, 7
      %v341 = vsub.s32 5, %v340
      %v342 = vrot.slane %v303, %v341
      %v345 = vlaneseq
      %v346 = vshrl.u32 %v345, 7
      %v347 = vsub.s32 1, %v346
      %v348 = vrot.slane %v338, %v347
      %v349 = vlaneseq
      %v350 = vshrl.u32 %v349, 7
      %v351 = vsub.s32 1, %v350
      %v352 = vrot.slane %v342, %v351
      %v353 = vmul.f32 %v333, %v348
      %v354 = vmul.f32 %v333, %v352
      %v355 = vadd.f32 %v329, %v353
      %v356 = vadd.f32 %v330, %v354
      %357 = vset.pattern.permute.xlu0 2
      %358 = vperm.xlu0 %357, %v304
      %v359 = vpop.permute.xlu0 %358
      %v361 = vlaneseq
      %v362 = vshrl.u32 %v361, 7
      %v363 = vsub.s32 2, %v362
      %v364 = vrot.slane %v303, %v363
      %v365 = vlaneseq
      %v366 = vshrl.u32 %v365, 7
      %v367 = vsub.s32 6, %v366
      %v368 = vrot.slane %v303, %v367
      %v371 = vlaneseq
      %v372 = vshrl.u32 %v371, 7
      %v373 = vsub.s32 2, %v372
      %v374 = vrot.slane %v364, %v373
      %v375 = vlaneseq
      %v376 = vshrl.u32 %v375, 7
      %v377 = vsub.s32 2, %v376
      %v378 = vrot.slane %v368, %v377
      %v379 = vmul.f32 %v359, %v374
      %v380 = vmul.f32 %v359, %v378
      %v381 = vadd.f32 %v355, %v379
      %v382 = vadd.f32 %v356, %v380
      %383 = vset.pattern.permute.xlu0 3
      %384 = vperm.xlu0 %383, %v304
      %v385 = vpop.permute.xlu0 %384
      %v387 = vlaneseq
      %v388 = vshrl.u32 %v387, 7
      %v389 = vsub.s32 3, %v388
      %v390 = vrot.slane %v303, %v389
      %v391 = vlaneseq
      %v392 = vshrl.u32 %v391, 7
      %v393 = vsub.s32 7, %v392
      %v394 = vrot.slane %v303, %v393
      %v397 = vlaneseq
      %v398 = vshrl.u32 %v397, 7
      %v399 = vsub.s32 3, %v398
      %v400 = vrot.slane %v390, %v399
      %v401 = vlaneseq
      %v402 = vshrl.u32 %v401, 7
      %v403 = vsub.s32 3, %v402
      %v404 = vrot.slane %v394, %v403
      %v405 = vmul.f32 %v385, %v400
      %v406 = vmul.f32 %v385, %v404
      %v407 = vadd.f32 %v381, %v405
      %v408 = vadd.f32 %v382, %v406
      %v409 = vadd.f32 %v407, %v408
      %410 = vadd.xlane.f32.xlu0 %v409
      %v411 = vpop.xlane.xlu0 %410
      %vm412 = vcmask 7168
      %413 = vst.msk [vmem:[%s264] sm:$0xff] %vm412, %v411
      %v414 = vmul.f32 %v407, %v407
      %v415 = vmul.f32 %v408, %v408
      %v416 = vadd.f32 %v414, %v415
      %417 = vadd.xlane.f32.xlu0 %v416
      %v418 = vpop.xlane.xlu0 %417
      %419 = vst.msk [vmem:[%s270] sm:$0xff] %vm412, %v418
      %s420 = sadd.s32 %s21, %s22
      %p421 = scmp.lt.s32.totalorder %s420, 1
      %s422 = scalar_select %p421, %s420, 1
      %s423 = smul.addr %s422, 8
      %s424 = scalar_lea.vmem %s4, %s423
      %s425 = sadd.s32 %s21, %s22
      %p426 = scmp.lt.s32.totalorder %s425, 1
      %s427 = scalar_select %p426, %s425, 1
      %s428 = smul.addr %s427, 8
      %s429 = scalar_lea.vmem %s5, %s428
      // Predicated region
      $region37: #{conv_dw_block.4} parent=35 // pred_check
        %p430 = pneg %p140
      $region38: #{conv_dw_block.4} parent=35 // pred_check_branch
        %432 = sbr.rel (%p430) target = $region40
      $region39: #{conv_dw_block.4} parent=35 // pred_region
        %s433 = sadd.s32 %s21, %s22
      $region40: #{conv_dw_block.4} parent=35 // pred_fallthru
        _
      // Predicated region
      $region41: #{conv_dw_block.4} parent=35 // pred_check
        %p434 = pneg %p168
      $region42: #{conv_dw_block.4} parent=35 // pred_check_branch
        %436 = sbr.rel (%p434) target = $region44
      $region43: #{conv_dw_block.4} parent=35 // pred_region
        %s437 = sadd.s32 %s21, %s22
      $region44: #{conv_dw_block.4} parent=35 // pred_fallthru
        _
    $region36: #{conv_dw_block.4} parent=5 // pred_fallthru
      _
    %p438 = scmp.le.s32.totalorder 2, %s12
    // Predicated region
    $region45: #{conv_dw_block.4} parent=5 // pred_check
      %p439 = pneg %p438
    $region46: #{conv_dw_block.4} parent=5 // pred_check_branch
      %441 = sbr.rel (%p439) target = $region48
    $region47: #{conv_dw_block.4} parent=5 // pred_region
      %s442 = ssub.s32 %s12, 2
      // Predicated region
      $region49: #{conv_dw_block.4} parent=47 // pred_check
        %p443 = pneg %p146
      $region50: #{conv_dw_block.4} parent=47 // pred_check_branch
        %445 = sbr.rel (%p443) target = $region52
      $region51: #{conv_dw_block.4} parent=47 // pred_region
        %s446 = sadd.s32 %s23, %s24
        %p447 = scmp.lt.s32.totalorder %s446, 1
        %s448 = scalar_select %p447, %s446, 1
        %s449 = smul.addr %s448, 8
        %s450 = scalar_lea.vmem %s4, %s449
      $region52: #{conv_dw_block.4} parent=47 // pred_fallthru
        _
      // Predicated region
      $region53: #{conv_dw_block.4} parent=47 // pred_check
        %p451 = pneg %p174
      $region54: #{conv_dw_block.4} parent=47 // pred_check_branch
        %453 = sbr.rel (%p451) target = $region56
      $region55: #{conv_dw_block.4} parent=47 // pred_region
        %s454 = sadd.s32 %s23, %s24
        %p455 = scmp.lt.s32.totalorder %s454, 1
        %s456 = scalar_select %p455, %s454, 1
        %s457 = smul.addr %s456, 8
        %s458 = scalar_lea.vmem %s5, %s457
      $region56: #{conv_dw_block.4} parent=47 // pred_fallthru
        _
    $region48: #{conv_dw_block.4} parent=5 // pred_fallthru
      _
  $region6: #{conv_dw_block.4} parent=0 // loop_footer
    %s16 = sadd.s32 1, %s12
  $region7: #{conv_dw_block.4} parent=0 // loop_footer_branch
    %11 = sbr.rel target = $region3
  $region8: #{conv_dw_block.4} parent=0 // loop_exit
    _

// kernel: conv_dw_block.5
$region0: #{conv_dw_block.5}
  #allocation0 [shape = 'u32[]', space=smem, size = 0x4, offset = 0x4, fixed_abs, tag = 'smem constant byte address 0x4 - core index']
  #allocation1 [shape = 'u32[144,128]{1,0:T(1,128)}', space=vmem, size = 0x12000, scoped, tag = 'internal scratch']
  %s0 = inlined_call_operand.vmem [shape: f32[2,4,256], index: 0, kind: input, shape index: {}]
  %s1 = inlined_call_operand.vmem [shape: f32[4,1], index: 1, kind: input, shape index: {}]
  %s2 = inlined_call_operand.vmem [shape: f32[4,1], index: 2, kind: input, shape index: {}]
  %s3 = inlined_call_operand.vmem [shape: f32[8,4], index: 3, kind: input, shape index: {}]
  %s4 = inlined_call_operand.vmem [shape: f32[8,1], index: 4, kind: input, shape index: {}]
  %s5 = inlined_call_operand.vmem [shape: f32[8,1], index: 5, kind: input, shape index: {}]
  %s6 = inlined_call_operand.vmem [shape: f32[2,8,256], index: 6, kind: output, shape index: {}]
  %s7 = sld [smem:[#allocation0]]
  $region57: #{conv_dw_block.5} parent=0
    _
  %s9 = ssub.s32 1, %s7
  %s10 = scalar_select 0, %s9, %s7
  loop: start=0, step=1, limit=4
  $region2: #{conv_dw_block.5} parent=0 // loop_pre_header
    _
  $region3: #{conv_dw_block.5} parent=0 // loop_header
    %s12 = sphi 0, %s16
    %p13 = scmp.ge.s32.totalorder %s12, 4
    %s19 = sphi 0, %s31
    %s20 = sphi 0, %s27
    %s21 = sphi 0, %s19
    %s22 = sphi 0, %s20
    %s23 = sphi 0, %s21
    %s24 = sphi 0, %s22
    %s36 = sphi 0, %s38
    %s39 = sphi 0, %s36
    %s40 = sphi 0, %s39
    %s56 = sphi 0, %s40
    %s60 = sphi 0, %s60
    %s62 = sphi 0, %s60
    %s63 = sphi 0, %s62
    %s77 = sphi 0, %s63
    %s81 = sphi 0, %s81
    %s83 = sphi 0, %s81
    %s84 = sphi 0, %s83
    %s98 = sphi 0, %s84
    %s102 = sphi 0, %s102
    %s104 = sphi 0, %s102
    %s105 = sphi 0, %s104
    %s119 = sphi 0, %s105
    %s123 = sphi 0, %s123
    %s125 = sphi 0, %s123
    %s126 = sphi 0, %s125
    %s140 = sphi 0, %s126
    %s144 = sphi 0, %s144
    %s146 = sphi 0, %s144
    %s147 = sphi 0, %s146
    %s161 = sphi 0, %s147
    %s169 = sphi 0, %s171
    %s172 = sphi 0, %s169
    %s173 = sphi 0, %s172
    %s189 = sphi 0, %s173
  $region4: #{conv_dw_block.5} parent=0 // loop_header_branch
    %15 = sbr.rel (%p13) target = $region8
  $region5: #{conv_dw_block.5} parent=0 // loop_body
    %s17 = ssub.s32 %s12, 1
    %s18 = ssub.s32 %s12, 2
    %s25 = sadd.s32 1, %s20
    %p26 = scmp.ge.s32.totalorder %s25, 1
    %s27 = scalar_select %p26, 0, %s25
    %s28 = sadd.s32 1, %s19
    %s29 = scalar_select %p26, %s28, %s19
    %p30 = scmp.ge.s32.totalorder %s29, 2
    %s31 = scalar_select %p30, 0, %s29
    %s32 = ssub.s32 %s19, %s31
    %s33 = ssub.s32 %s20, %s27
    %s34 = sor.u32 %s32, %s33
    %p35 = scmp.eq.s32.totalorder %s34, 0
    %s37 = sadd.s32 %s36, 1
    %s38 = scalar_select %p35, %s36, %s37
    %p41 = pneg %p35
    %p42 = scmp.eq.s32.totalorder %s12, 1
    %p43 = por %p41, %p42
    %p44 = scmp.ne.s32.totalorder %s36, %s39
    %p45 = scmp.eq.s32.totalorder %s12, 0
    %p46 = por %p44, %p45
    %p47 = scmp.ne.s32.totalorder %s36, %s39
    %p48 = scmp.eq.s32.totalorder %s17, 1
    %p49 = por %p47, %p48
    %p50 = scmp.ne.s32.totalorder %s39, %s40
    %p51 = scmp.eq.s32.totalorder %s17, 0
    %p52 = por %p50, %p51
    %p53 = scmp.ne.s32.totalorder %s39, %s40
    %p54 = scmp.eq.s32.totalorder %s18, 1
    %p55 = por %p53, %p54
    %p57 = scmp.ne.s32.totalorder %s40, %s56
    %p58 = scmp.eq.s32.totalorder %s18, 0
    %p59 = por %p57, %p58
    %s61 = sadd.s32 %s60, 1
    %p64 = scmp.eq.s32.totalorder %s12, 1
    %p65 = scmp.ne.s32.totalorder %s60, %s62
    %p66 = scmp.eq.s32.totalorder %s12, 0
    %p67 = por %p65, %p66
    %p68 = scmp.ne.s32.totalorder %s60, %s62
    %p69 = scmp.eq.s32.totalorder %s17, 1
    %p70 = por %p68, %p69
    %p71 = scmp.ne.s32.totalorder %s62, %s63
    %p72 = scmp.eq.s32.totalorder %s17, 0
    %p73 = por %p71, %p72
    %p74 = scmp.ne.s32.totalorder %s62, %s63
    %p75 = scmp.eq.s32.totalorder %s18, 1
    %p76 = por %p74, %p75
    %p78 = scmp.ne.s32.totalorder %s63, %s77
    %p79 = scmp.eq.s32.totalorder %s18, 0
    %p80 = por %p78, %p79
    %s82 = sadd.s32 %s81, 1
    %p85 = scmp.eq.s32.totalorder %s12, 1
    %p86 = scmp.ne.s32.totalorder %s81, %s83
    %p87 = scmp.eq.s32.totalorder %s12, 0
    %p88 = por %p86, %p87
    %p89 = scmp.ne.s32.totalorder %s81, %s83
    %p90 = scmp.eq.s32.totalorder %s17, 1
    %p91 = por %p89, %p90
    %p92 = scmp.ne.s32.totalorder %s83, %s84
    %p93 = scmp.eq.s32.totalorder %s17, 0
    %p94 = por %p92, %p93
    %p95 = scmp.ne.s32.totalorder %s83, %s84
    %p96 = scmp.eq.s32.totalorder %s18, 1
    %p97 = por %p95, %p96
    %p99 = scmp.ne.s32.totalorder %s84, %s98
    %p100 = scmp.eq.s32.totalorder %s18, 0
    %p101 = por %p99, %p100
    %s103 = sadd.s32 %s102, 1
    %p106 = scmp.eq.s32.totalorder %s12, 1
    %p107 = scmp.ne.s32.totalorder %s102, %s104
    %p108 = scmp.eq.s32.totalorder %s12, 0
    %p109 = por %p107, %p108
    %p110 = scmp.ne.s32.totalorder %s102, %s104
    %p111 = scmp.eq.s32.totalorder %s17, 1
    %p112 = por %p110, %p111
    %p113 = scmp.ne.s32.totalorder %s104, %s105
    %p114 = scmp.eq.s32.totalorder %s17, 0
    %p115 = por %p113, %p114
    %p116 = scmp.ne.s32.totalorder %s104, %s105
    %p117 = scmp.eq.s32.totalorder %s18, 1
    %p118 = por %p116, %p117
    %p120 = scmp.ne.s32.totalorder %s105, %s119
    %p121 = scmp.eq.s32.totalorder %s18, 0
    %p122 = por %p120, %p121
    %s124 = sadd.s32 %s123, 1
    %p127 = scmp.eq.s32.totalorder %s12, 1
    %p128 = scmp.ne.s32.totalorder %s123, %s125
    %p129 = scmp.eq.s32.totalorder %s12, 0
    %p130 = por %p128, %p129
    %p131 = scmp.ne.s32.totalorder %s123, %s125
    %p132 = scmp.eq.s32.totalorder %s17, 1
    %p133 = por %p131, %p132
    %p134 = scmp.ne.s32.totalorder %s125, %s126
    %p135 = scmp.eq.s32.totalorder %s17, 0
    %p136 = por %p134, %p135
    %p137 = scmp.ne.s32.totalorder %s125, %s126
    %p138 = scmp.eq.s32.totalorder %s18, 1
    %p139 = por %p137, %p138
    %p141 = scmp.ne.s32.totalorder %s126, %s140
    %p142 = scmp.eq.s32.totalorder %s18, 0
    %p143 = por %p141, %p142
    %s145 = sadd.s32 %s144, 1
    %p148 = scmp.eq.s32.totalorder %s12, 1
    %p149 = scmp.ne.s32.totalorder %s144, %s146
    %p150 = scmp.eq.s32.totalorder %s12, 0
    %p151 = por %p149, %p150
    %p152 = scmp.ne.s32.totalorder %s144, %s146
    %p153 = scmp.eq.s32.totalorder %s17, 1
    %p154 = por %p152, %p153
    %p155 = scmp.ne.s32.totalorder %s146, %s147
    %p156 = scmp.eq.s32.totalorder %s17, 0
    %p157 = por %p155, %p156
    %p158 = scmp.ne.s32.totalorder %s146, %s147
    %p159 = scmp.eq.s32.totalorder %s18, 1
    %p160 = por %p158, %p159
    %p162 = scmp.ne.s32.totalorder %s147, %s161
    %p163 = scmp.eq.s32.totalorder %s18, 0
    %p164 = por %p162, %p163
    %s165 = ssub.s32 %s19, %s31
    %s166 = ssub.s32 %s20, %s27
    %s167 = sor.u32 %s165, %s166
    %p168 = scmp.eq.s32.totalorder %s167, 0
    %s170 = sadd.s32 %s169, 1
    %s171 = scalar_select %p168, %s169, %s170
    %p174 = pneg %p168
    %p175 = scmp.eq.s32.totalorder %s12, 1
    %p176 = por %p174, %p175
    %p177 = scmp.ne.s32.totalorder %s169, %s172
    %p178 = scmp.eq.s32.totalorder %s12, 0
    %p179 = por %p177, %p178
    %p180 = scmp.ne.s32.totalorder %s169, %s172
    %p181 = scmp.eq.s32.totalorder %s17, 1
    %p182 = por %p180, %p181
    %p183 = scmp.ne.s32.totalorder %s172, %s173
    %p184 = scmp.eq.s32.totalorder %s17, 0
    %p185 = por %p183, %p184
    %p186 = scmp.ne.s32.totalorder %s172, %s173
    %p187 = scmp.eq.s32.totalorder %s18, 1
    %p188 = por %p186, %p187
    %p190 = scmp.ne.s32.totalorder %s173, %s189
    %p191 = scmp.eq.s32.totalorder %s18, 0
    %p192 = por %p190, %p191
    %p193 = scmp.le.s32.totalorder 1, %s12
    %p194 = scmp.lt.s32.totalorder %s12, 3
    %p195 = pnand %p193, %p194
    %p196 = pneg %p195
    // Predicated region
    $region9: #{conv_dw_block.5} parent=5 // pred_check
      _
    $region10: #{conv_dw_block.5} parent=5 // pred_check_branch
      %198 = sbr.rel (%p195) target = $region12
    $region11: #{conv_dw_block.5} parent=5 // pred_region
      %s199 = ssub.s32 %s12, 1
      // Predicated region
      $region13: #{conv_dw_block.5} parent=11 // pred_check
        %p200 = pneg %p73
      $region14: #{conv_dw_block.5} parent=11 // pred_check_branch
        %202 = sbr.rel (%p200) target = $region16
      $region15: #{conv_dw_block.5} parent=11 // pred_region
        _
      $region16: #{conv_dw_block.5} parent=11 // pred_fallthru
        _
      // Predicated region
      $region17: #{conv_dw_block.5} parent=11 // pred_check
        %p203 = pneg %p94
      $region18: #{conv_dw_block.5} parent=11 // pred_check_branch
        %205 = sbr.rel (%p203) target = $region20
      $region19: #{conv_dw_block.5} parent=11 // pred_region
        _
      $region20: #{conv_dw_block.5} parent=11 // pred_fallthru
        _
      // Predicated region
      $region21: #{conv_dw_block.5} parent=11 // pred_check
        %p206 = pneg %p115
      $region22: #{conv_dw_block.5} parent=11 // pred_check_branch
        %208 = sbr.rel (%p206) target = $region24
      $region23: #{conv_dw_block.5} parent=11 // pred_region
        _
      $region24: #{conv_dw_block.5} parent=11 // pred_fallthru
        _
      // Predicated region
      $region25: #{conv_dw_block.5} parent=11 // pred_check
        %p209 = pneg %p136
      $region26: #{conv_dw_block.5} parent=11 // pred_check_branch
        %211 = sbr.rel (%p209) target = $region28
      $region27: #{conv_dw_block.5} parent=11 // pred_region
        _
      $region28: #{conv_dw_block.5} parent=11 // pred_fallthru
        _
      // Predicated region
      $region29: #{conv_dw_block.5} parent=11 // pred_check
        %p212 = pneg %p157
      $region30: #{conv_dw_block.5} parent=11 // pred_check_branch
        %214 = sbr.rel (%p212) target = $region32
      $region31: #{conv_dw_block.5} parent=11 // pred_region
        _
      $region32: #{conv_dw_block.5} parent=11 // pred_fallthru
        _
    $region12: #{conv_dw_block.5} parent=5 // pred_fallthru
      _
    %p215 = scmp.lt.s32.totalorder %s12, 2
    // Predicated region
    $region33: #{conv_dw_block.5} parent=5 // pred_check
      %p216 = pneg %p215
    $region34: #{conv_dw_block.5} parent=5 // pred_check_branch
      %218 = sbr.rel (%p216) target = $region36
    $region35: #{conv_dw_block.5} parent=5 // pred_region
      // Predicated region
      $region37: #{conv_dw_block.5} parent=35 // pred_check
        %p219 = pneg %p46
      $region38: #{conv_dw_block.5} parent=35 // pred_check_branch
        %221 = sbr.rel (%p219) target = $region40
      $region39: #{conv_dw_block.5} parent=35 // pred_region
        %s222 = smul.u32 2, %s20
        %p223 = scmp.lt.s32.totalorder %s19, 1
        %s224 = scalar_select %p223, %s19, 1
        %p225 = scmp.lt.s32.totalorder %s222, 1
        %s226 = scalar_select %p225, %s222, 1
        %s227 = smul.addr %s224, 2
        %s228 = sadd.s32 %s226, %s227
        %s229 = smul.addr %s228, 4
        %s230 = scalar_lea.vmem %s0, %s229
        %s231 = smul.u32 2, %s20
      $region40: #{conv_dw_block.5} parent=35 // pred_fallthru
        _
    $region36: #{conv_dw_block.5} parent=5 // pred_fallthru
      _
    %p232 = scmp.le.s32.totalorder 1, %s12
    %p233 = scmp.lt.s32.totalorder %s12, 3
    %p234 = pnand %p232, %p233
    %p235 = pneg %p234
    // Predicated region
    $region41: #{conv_dw_block.5} parent=5 // pred_check
      _
    $region42: #{conv_dw_block.5} parent=5 // pred_check_branch
      %237 = sbr.rel (%p234) target = $region44
    $region43: #{conv_dw_block.5} parent=5 // pred_region
      %s238 = ssub.s32 %s12, 1
      %s239 = smul.u32 2, %s22
      %p240 = scmp.lt.s32.totalorder %s21, 1
      %s241 = scalar_select %p240, %s21, 1
      %p242 = scmp.lt.s32.totalorder %s239, 1
      %s243 = scalar_select %p242, %s239, 1
      %s244 = smul.addr %s241, 2
      %s245 = sadd.s32 %s243, %s244
      %s246 = smul.addr %s245, 4
      %s247 = scalar_lea.vmem %s0, %s246
      %p248 = pneg %p52
      %p249 = pneg %p49
      %p250 = pneg %p73
      %p251 = pneg %p70
      %p252 = pneg %p94
      %p253 = pneg %p91
      %p254 = pneg %p115
      %p255 = pneg %p112
      %p256 = pneg %p136
      %p257 = pneg %p133
      %p258 = pneg %p157
      %p259 = pneg %p154
      %p260 = pneg %p185
      %p261 = pneg %p182
      %s262 = smul.u32 2, %s22
      %p263 = scmp.lt.s32.totalorder %s21, 1
      %s264 = scalar_select %p263, %s21, 1
      %p265 = scmp.lt.s32.totalorder %s262, 1
      %s266 = scalar_select %p265, %s262, 1
      %s267 = smul.addr %s264, 2
      %s268 = sadd.s32 %s266, %s267
      %s269 = smul.addr %s268, 8
      %s270 = scalar_lea.vmem %s6, %s269
      %s271 = smul.u32 2, %s22
      %p272 = scmp.lt.s32.totalorder %s21, 1
      %s273 = scalar_select %p272, %s21, 1
      %p274 = scmp.lt.s32.totalorder %s271, 1
      %s275 = scalar_select %p274, %s271, 1
      %s276 = smul.addr %s273, 2
      %s277 = sadd.s32 %s275, %s276
      %s278 = smul.addr %s277, 4
      %s279 = scalar_lea.vmem %s0, %s278
      %s280 = smul.u32 2, %s22
      %s281 = smul.u32 2, %s22
      %p282 = scmp.lt.s32.totalorder %s21, 1
      %s283 = scalar_select %p282, %s21, 1
      %p284 = scmp.lt.s32.totalorder %s281, 1
      %s285 = scalar_select %p284, %s281, 1
      %s286 = smul.addr %s283, 2
      %s287 = sadd.s32 %s285, %s286
      %s288 = smul.addr %s287, 8
      %s289 = scalar_lea.vmem %s6, %s288
      %s290 = smul.u32 2, %s22
      %v291 = vld [vmem:[%s279] sm:$0xff]
      %v292 = vld [vmem:[%s1] sm:$0xf]
      %294 = vset.pattern.permute.xlu0 0
      %295 = vperm.xlu0 %294, %v292
      %v296 = vpop.permute.xlu0 %295
      %v298 = vunpack.c.l.s4 839922192
      %v299 = vunpack.c.0.s8 %v298
      %v300 = vlaneseq
      %v301 = vshrl.u32 %v300, 7
      %v302 = vsub.s32 %v299, %v301
      %v303 = vrot.slane %v296, %v302
      %v305 = vmul.f32 %v291, %v303
      %v306 = vld [vmem:[%s2] sm:$0xf]
      %308 = vset.pattern.permute.xlu0 0
      %309 = vperm.xlu0 %308, %v306
      %v310 = vpop.permute.xlu0 %309
      %v312 = vunpack.c.l.s4 839922192
      %v313 = vunpack.c.0.s8 %v312
      %v314 = vlaneseq
      %v315 = vshrl.u32 %v314, 7
      %v316 = vsub.s32 %v313, %v315
      %v317 = vrot.slane %v310, %v316
      %v319 = vadd.f32 %v305, %v317
      %vm320 = vcmp.gt.f32.partialorder %v319, 0.0
      %v321 = vmul.f32 %v319, 0.01
      %v322 = vsel %vm320, %v319, %v321
      %v323 = vld [vmem:[%s3] sm:$0xff]
      %325 = vset.pattern.permute.xlu0 0
      %326 = vperm.xlu0 %325, %v323
      %v327 = vpop.permute.xlu0 %326
      %v330 = vlaneseq
      %v331 = vshrl.u32 %v330, 7
      %v332 = vsub.s32 0, %v331
      %v333 = vrot.slane %v322, %v332
      %v334 = vlaneseq
      %v335 = vshrl.u32 %v334, 7
      %v336 = vsub.s32 4, %v335
      %v337 = vrot.slane %v322, %v336
      %v340 = vlaneseq
      %v341 = vshrl.u32 %v340, 7
      %v342 = vsub.s32 0, %v341
      %v343 = vrot.slane %v333, %v342
      %v344 = vlaneseq
      %v345 = vshrl.u32 %v344, 7
      %v346 = vsub.s32 0, %v345
      %v347 = vrot.slane %v337, %v346
      %v348 = vmul.f32 %v327, %v343
      %v349 = vmul.f32 %v327, %v347
      %350 = vset.pattern.permute.xlu0 1
      %351 = vperm.xlu0 %350, %v323
      %v352 = vpop.permute.xlu0 %351
      %v354 = vlaneseq
      %v355 = vshrl.u32 %v354, 7
      %v356 = vsub.s32 1, %v355
      %v357 = vrot.slane %v322, %v356
      %v358 = vlaneseq
      %v359 = vshrl.u32 %v358, 7
      %v360 = vsub.s32 5, %v359
      %v361 = vrot.slane %v322, %v360
      %v364 = vlaneseq
      %v365 = vshrl.u32 %v364, 7
      %v366 = vsub.s32 1, %v365
      %v367 = vrot.slane %v357, %v366
      %v368 = vlaneseq
      %v369 = vshrl.u32 %v368, 7
      %v370 = vsub.s32 1, %v369
      %v371 = vrot.slane %v361, %v370
      %v372 = vmul.f32 %v352, %v367
      %v373 = vmul.f32 %v352, %v371
      %v374 = vadd.f32 %v348, %v372
      %v375 = vadd.f32 %v349, %v373
      %376 = vset.pattern.permute.xlu0 2
      %377 = vperm.xlu0 %376, %v323
      %v378 = vpop.permute.xlu0 %377
      %v380 = vlaneseq
      %v381 = vshrl.u32 %v380, 7
      %v382 = vsub.s32 2, %v381
      %v383 = vrot.slane %v322, %v382
      %v384 = vlaneseq
      %v385 = vshrl.u32 %v384, 7
      %v386 = vsub.s32 6, %v385
      %v387 = vrot.slane %v322, %v386
      %v390 = vlaneseq
      %v391 = vshrl.u32 %v390, 7
      %v392 = vsub.s32 2, %v391
      %v393 = vrot.slane %v383, %v392
      %v394 = vlaneseq
      %v395 = vshrl.u32 %v394, 7
      %v396 = vsub.s32 2, %v395
      %v397 = vrot.slane %v387, %v396
      %v398 = vmul.f32 %v378, %v393
      %v399 = vmul.f32 %v378, %v397
      %v400 = vadd.f32 %v374, %v398
      %v401 = vadd.f32 %v375, %v399
      %402 = vset.pattern.permute.xlu0 3
      %403 = vperm.xlu0 %402, %v323
      %v404 = vpop.permute.xlu0 %403
      %v406 = vlaneseq
      %v407 = vshrl.u32 %v406, 7
      %v408 = vsub.s32 3, %v407
      %v409 = vrot.slane %v322, %v408
      %v410 = vlaneseq
      %v411 = vshrl.u32 %v410, 7
      %v412 = vsub.s32 7, %v411
      %v413 = vrot.slane %v322, %v412
      %v416 = vlaneseq
      %v417 = vshrl.u32 %v416, 7
      %v418 = vsub.s32 3, %v417
      %v419 = vrot.slane %v409, %v418
      %v420 = vlaneseq
      %v421 = vshrl.u32 %v420, 7
      %v422 = vsub.s32 3, %v421
      %v423 = vrot.slane %v413, %v422
      %v424 = vmul.f32 %v404, %v419
      %v425 = vmul.f32 %v404, %v423
      %v426 = vadd.f32 %v400, %v424
      %v427 = vadd.f32 %v401, %v425
      %v428 = vld [vmem:[%s4] sm:$0xff]
      %430 = vset.pattern.permute.xlu0 0
      %431 = vperm.xlu0 %430, %v428
      %v432 = vpop.permute.xlu0 %431
      %v434 = vmul.f32 %v426, %v432
      %v435 = vmul.f32 %v427, %v432
      %v436 = vld [vmem:[%s5] sm:$0xff]
      %438 = vset.pattern.permute.xlu0 0
      %439 = vperm.xlu0 %438, %v436
      %v440 = vpop.permute.xlu0 %439
      %v442 = vadd.f32 %v434, %v440
      %v443 = vadd.f32 %v435, %v440
      %vm444 = vcmp.gt.f32.partialorder %v442, 0.0
      %vm445 = vcmp.gt.f32.partialorder %v443, 0.0
      %v446 = vmul.f32 %v442, 0.01
      %v447 = vmul.f32 %v443, 0.01
      %v448 = vsel %vm444, %v442, %v446
      %v449 = vsel %vm445, %v443, %v447
      %450 = vst [vmem:[%s289] sm:$0xff] %v448
      %451 = vst [vmem:[%s289 + $0x8] sm:$0xff] %v449
      %s452 = smul.u32 2, %s22
      %p453 = scmp.lt.s32.totalorder %s21, 1
      %s454 = scalar_select %p453, %s21, 1
      %p455 = scmp.lt.s32.totalorder %s452, 1
      %s456 = scalar_select %p455, %s452, 1
      %s457 = smul.addr %s454, 2
      %s458 = sadd.s32 %s456, %s457
      %s459 = smul.addr %s458, 8
      %s460 = scalar_lea.vmem %s6, %s459
      // Predicated region
      $region45: #{conv_dw_block.5} parent=43 // pred_check
        %p461 = pneg %p182
      $region46: #{conv_dw_block.5} parent=43 // pred_check_branch
        %463 = sbr.rel (%p461) target = $region48
      $region47: #{conv_dw_block.5} parent=43 // pred_region
        %s464 = smul.u32 2, %s22
      $region48: #{conv_dw_block.5} parent=43 // pred_fallthru
        _
    $region44: #{conv_dw_block.5} parent=5 // pred_fallthru
      _
    %p465 = scmp.le.s32.totalorder 2, %s12
    // Predicated region
    $region49: #{conv_dw_block.5} parent=5 // pred_check
      %p466 = pneg %p465
    $region50: #{conv_dw_block.5} parent=5 // pred_check_branch
      %468 = sbr.rel (%p466) target = $region52
    $region51: #{conv_dw_block.5} parent=5 // pred_region
      %s469 = ssub.s32 %s12, 2
      // Predicated region
      $region53: #{conv_dw_block.5} parent=51 // pred_check
        %p470 = pneg %p188
      $region54: #{conv_dw_block.5} parent=51 // pred_check_branch
        %472 = sbr.rel (%p470) target = $region56
      $region55: #{conv_dw_block.5} parent=51 // pred_region
        %s473 = smul.u32 2, %s24
        %p474 = scmp.lt.s32.totalorder %s23, 1
        %s475 = scalar_select %p474, %s23, 1
        %p476 = scmp.lt.s32.totalorder %s473, 1
        %s477 = scalar_select %p476, %s473, 1
        %s478 = smul.addr %s475, 2
        %s479 = sadd.s32 %s477, %s478
        %s480 = smul.addr %s479, 8
        %s481 = scalar_lea.vmem %s6, %s480
      $region56: #{conv_dw_block.5} parent=51 // pred_fallthru
        _
    $region52: #{conv_dw_block.5} parent=5 // pred_fallthru
      _
  $region6: #{conv_dw_block.5} parent=0 // loop_footer
    %s16 = sadd.s32 1, %s12
  $region7: #{conv_dw_block.5} parent=0 // loop_footer_branch
    %11 = sbr.rel target = $region3
  $region8: #{conv_dw_block.5} parent=0 // loop_exit
    _

// kernel: conv_dw_block.3
$region0: #{conv_dw_block.3}
  #allocation0 [shape = 'u32[]', space=smem, size = 0x4, offset = 0x4, fixed_abs, tag = 'smem constant byte address 0x4 - core index']
  #allocation1 [shape = 'u32[144,128]{1,0:T(1,128)}', space=vmem, size = 0x12000, scoped, tag = 'internal scratch']
  #allocation2 [shape = 'f32[4,18,18]{2,1,0:T(8,128)}', space=vmem, size = 0xc000, scoped, tag = 'scratch operand']
  %s0 = inlined_call_operand.hbm [shape: f32[2,4,16,16], index: 0, kind: input, shape index: {}]
  %s1 = inlined_call_operand.vmem [shape: f32[4,9], index: 1, kind: input, shape index: {}]
  %s2 = inlined_call_operand.vmem [shape: f32[2,4,256], index: 2, kind: output, shape index: {0}]
  %s3 = inlined_call_operand.vmem [shape: f32[2,4,1], index: 3, kind: output, shape index: {1}]
  %s4 = inlined_call_operand.vmem [shape: f32[2,4,1], index: 4, kind: output, shape index: {2}]
  %5 = xla_tuple %s2, %s3, %s4
  %s6 = sld [smem:[#allocation0]]
  $region61: #{conv_dw_block.3} parent=0
    _
  %s8 = ssub.s32 1, %s6
  %s9 = scalar_select 0, %s8, %s6
  $region1: #{conv_dw_block.3} parent=0
    #allocation3 [shape = 'u8[65536]{0}', space=vmem, size = 0x10000, scoped, tag = 'input window, operand 0']
    #allocation4 [shape = 's32[2]{0}', space=sflag, size = 0x8, scoped, tag = 'scoped memory for conv_dw_block.3']
    %10 = vsyncpa [#allocation4], 0
    %s11 = scalar_lea.sflag [#allocation4], 1
    %12 = vsyncpa %s11, 0
    loop: start=0, step=1, limit=4
    $region2: #{conv_dw_block.3} parent=1 // loop_pre_header
      _
    $region3: #{conv_dw_block.3} parent=1 // loop_header
      %s14 = sphi 0, %s18
      %p15 = scmp.ge.s32.totalorder %s14, 4
      %s24 = sphi 0, %s26
      %s27 = sphi 0, %s24
      %s28 = sphi 0, %s27
      %s44 = sphi 0, %s28
      %s48 = sphi 0, %s48
      %s50 = sphi 0, %s48
      %s51 = sphi 0, %s50
      %s65 = sphi 0, %s51
      %s71 = sphi 0, %s73
      %s74 = sphi 0, %s71
      %s75 = sphi 0, %s74
      %s91 = sphi 0, %s75
      %s97 = sphi 0, %s99
      %s100 = sphi 0, %s97
      %s101 = sphi 0, %s100
      %s117 = sphi 0, %s101
      %s123 = sphi 0, %s125
      %s126 = sphi 0, %s123
      %s127 = sphi 0, %s126
      %s143 = sphi 0, %s127
    $region4: #{conv_dw_block.3} parent=1 // loop_header_branch
      %17 = sbr.rel (%p15) target = $region8
    $region5: #{conv_dw_block.3} parent=1 // loop_body
      %s19 = ssub.s32 %s14, 1
      %s20 = ssub.s32 %s14, 2
      %s21 = sadd.s32 %s14, 1
      %s22 = ssub.s32 %s14, %s21
      %p23 = scmp.eq.s32.totalorder %s22, 0
      %s25 = sadd.s32 %s24, 1
      %s26 = scalar_select %p23, %s24, %s25
      %p29 = pneg %p23
      %p30 = scmp.eq.s32.totalorder %s14, 1
      %p31 = por %p29, %p30
      %p32 = scmp.ne.s32.totalorder %s24, %s27
      %p33 = scmp.eq.s32.totalorder %s14, 0
      %p34 = por %p32, %p33
      %p35 = scmp.ne.s32.totalorder %s24, %s27
      %p36 = scmp.eq.s32.totalorder %s19, 1
      %p37 = por %p35, %p36
      %p38 = scmp.ne.s32.totalorder %s27, %s28
      %p39 = scmp.eq.s32.totalorder %s19, 0
      %p40 = por %p38, %p39
      %p41 = scmp.ne.s32.totalorder %s27, %s28
      %p42 = scmp.eq.s32.totalorder %s20, 1
      %p43 = por %p41, %p42
      %p45 = scmp.ne.s32.totalorder %s28, %s44
      %p46 = scmp.eq.s32.totalorder %s20, 0
      %p47 = por %p45, %p46
      %s49 = sadd.s32 %s48, 1
      %p52 = scmp.eq.s32.totalorder %s14, 1
      %p53 = scmp.ne.s32.totalorder %s48, %s50
      %p54 = scmp.eq.s32.totalorder %s14, 0
      %p55 = por %p53, %p54
      %p56 = scmp.ne.s32.totalorder %s48, %s50
      %p57 = scmp.eq.s32.totalorder %s19, 1
      %p58 = por %p56, %p57
      %p59 = scmp.ne.s32.totalorder %s50, %s51
      %p60 = scmp.eq.s32.totalorder %s19, 0
      %p61 = por %p59, %p60
      %p62 = scmp.ne.s32.totalorder %s50, %s51
      %p63 = scmp.eq.s32.totalorder %s20, 1
      %p64 = por %p62, %p63
      %p66 = scmp.ne.s32.totalorder %s51, %s65
      %p67 = scmp.eq.s32.totalorder %s20, 0
      %p68 = por %p66, %p67
      %s69 = ssub.s32 %s14, %s21
      %p70 = scmp.eq.s32.totalorder %s69, 0
      %s72 = sadd.s32 %s71, 1
      %s73 = scalar_select %p70, %s71, %s72
      %p76 = pneg %p70
      %p77 = scmp.eq.s32.totalorder %s14, 1
      %p78 = por %p76, %p77
      %p79 = scmp.ne.s32.totalorder %s71, %s74
      %p80 = scmp.eq.s32.totalorder %s14, 0
      %p81 = por %p79, %p80
      %p82 = scmp.ne.s32.totalorder %s71, %s74
      %p83 = scmp.eq.s32.totalorder %s19, 1
      %p84 = por %p82, %p83
      %p85 = scmp.ne.s32.totalorder %s74, %s75
      %p86 = scmp.eq.s32.totalorder %s19, 0
      %p87 = por %p85, %p86
      %p88 = scmp.ne.s32.totalorder %s74, %s75
      %p89 = scmp.eq.s32.totalorder %s20, 1
      %p90 = por %p88, %p89
      %p92 = scmp.ne.s32.totalorder %s75, %s91
      %p93 = scmp.eq.s32.totalorder %s20, 0
      %p94 = por %p92, %p93
      %s95 = ssub.s32 %s14, %s21
      %p96 = scmp.eq.s32.totalorder %s95, 0
      %s98 = sadd.s32 %s97, 1
      %s99 = scalar_select %p96, %s97, %s98
      %p102 = pneg %p96
      %p103 = scmp.eq.s32.totalorder %s14, 1
      %p104 = por %p102, %p103
      %p105 = scmp.ne.s32.totalorder %s97, %s100
      %p106 = scmp.eq.s32.totalorder %s14, 0
      %p107 = por %p105, %p106
      %p108 = scmp.ne.s32.totalorder %s97, %s100
      %p109 = scmp.eq.s32.totalorder %s19, 1
      %p110 = por %p108, %p109
      %p111 = scmp.ne.s32.totalorder %s100, %s101
      %p112 = scmp.eq.s32.totalorder %s19, 0
      %p113 = por %p111, %p112
      %p114 = scmp.ne.s32.totalorder %s100, %s101
      %p115 = scmp.eq.s32.totalorder %s20, 1
      %p116 = por %p114, %p115
      %p118 = scmp.ne.s32.totalorder %s101, %s117
      %p119 = scmp.eq.s32.totalorder %s20, 0
      %p120 = por %p118, %p119
      %s121 = ssub.s32 %s14, %s21
      %p122 = scmp.eq.s32.totalorder %s121, 0
      %s124 = sadd.s32 %s123, 1
      %s125 = scalar_select %p122, %s123, %s124
      %p128 = pneg %p122
      %p129 = scmp.eq.s32.totalorder %s14, 1
      %p130 = por %p128, %p129
      %p131 = scmp.ne.s32.totalorder %s123, %s126
      %p132 = scmp.eq.s32.totalorder %s14, 0
      %p133 = por %p131, %p132
      %p134 = scmp.ne.s32.totalorder %s123, %s126
      %p135 = scmp.eq.s32.totalorder %s19, 1
      %p136 = por %p134, %p135
      %p137 = scmp.ne.s32.totalorder %s126, %s127
      %p138 = scmp.eq.s32.totalorder %s19, 0
      %p139 = por %p137, %p138
      %p140 = scmp.ne.s32.totalorder %s126, %s127
      %p141 = scmp.eq.s32.totalorder %s20, 1
      %p142 = por %p140, %p141
      %p144 = scmp.ne.s32.totalorder %s127, %s143
      %p145 = scmp.eq.s32.totalorder %s20, 0
      %p146 = por %p144, %p145
      %p147 = scmp.le.s32.totalorder 1, %s14
      %p148 = scmp.lt.s32.totalorder %s14, 3
      %p149 = pnand %p147, %p148
      %p150 = pneg %p149
      // Predicated region
      $region9: #{conv_dw_block.3} parent=5 // pred_check
        _
      $region10: #{conv_dw_block.3} parent=5 // pred_check_branch
        %152 = sbr.rel (%p149) target = $region12
      $region11: #{conv_dw_block.3} parent=5 // pred_region
        %s153 = ssub.s32 %s14, 1
        // Predicated region
        $region13: #{conv_dw_block.3} parent=11 // pred_check
          %p154 = pneg %p61
        $region14: #{conv_dw_block.3} parent=11 // pred_check_branch
          %156 = sbr.rel (%p154) target = $region16
        $region15: #{conv_dw_block.3} parent=11 // pred_region
          _
        $region16: #{conv_dw_block.3} parent=11 // pred_fallthru
          _
      $region12: #{conv_dw_block.3} parent=5 // pred_fallthru
        _
      %p157 = scmp.lt.s32.totalorder %s14, 2
      // Predicated region
      $region17: #{conv_dw_block.3} parent=5 // pred_check
        %p158 = pneg %p157
      $region18: #{conv_dw_block.3} parent=5 // pred_check_branch
        %160 = sbr.rel (%p158) target = $region20
      $region19: #{conv_dw_block.3} parent=5 // pred_region
        // Predicated region
        $region21: #{conv_dw_block.3} parent=19 // pred_check
          %p161 = pneg %p34
        $region22: #{conv_dw_block.3} parent=19 // pred_check_branch
          %163 = sbr.rel (%p161) target = $region24
        $region23: #{conv_dw_block.3} parent=19 // pred_region
          %s164 = sand.u32 %s24, 1
          %s165 = scalar_lea.sflag [#allocation4], %s164
          %s166 = sand.u32 %s24, 1
          %s167 = smul.addr %s166, 64
          %s168 = scalar_lea.vmem [#allocation3], %s167
          %s170 = ssub.s32 1024, 1024
          %171 = vsyncadd %s165, %s170
          %s172 = smul.addr %s14, 8
          %s173 = smul.addr %s172, 128
          %s174 = scalar_lea.hbm %s0, %s173
          %s175 = sshll.u32 %s168, 4
          %s176 = int_to_ptr.vmem [resolvable:$true] %s175
          %181 = dma.hbm_to_vmem [thread:$0]  %s174, 1024, %s176, %s165, 128, 128, 8
        $region24: #{conv_dw_block.3} parent=19 // pred_fallthru
          _
      $region20: #{conv_dw_block.3} parent=5 // pred_fallthru
        _
      %p182 = scmp.le.s32.totalorder 1, %s14
      %p183 = scmp.lt.s32.totalorder %s14, 3
      %p184 = pnand %p182, %p183
      %p185 = pneg %p184
      // Predicated region
      $region25: #{conv_dw_block.3} parent=5 // pred_check
        _
      $region26: #{conv_dw_block.3} parent=5 // pred_check_branch
        %187 = sbr.rel (%p184) target = $region28
      $region27: #{conv_dw_block.3} parent=5 // pred_region
        %s188 = ssub.s32 %s14, 1
        %s189 = sand.u32 %s27, 1
        %s190 = scalar_lea.sflag [#allocation4], %s189
        %s191 = sand.u32 %s27, 1
        %s192 = smul.addr %s191, 64
        %s193 = scalar_lea.vmem [#allocation3], %s192
        // Predicated region
        $region29: #{conv_dw_block.3} parent=27 // pred_check
          %p194 = pneg %p40
        $region30: #{conv_dw_block.3} parent=27 // pred_check_branch
          %196 = sbr.rel (%p194) target = $region32
        $region31: #{conv_dw_block.3} parent=27 // pred_region
          %197 = dma.done %s190, 1024
        $region32: #{conv_dw_block.3} parent=27 // pred_fallthru
          _
        %s198 = sand.u32 %s27, 1
        %s199 = scalar_lea.sflag [#allocation4], %s198
        %s200 = sand.u32 %s27, 1
        %s201 = smul.addr %s200, 64
        %s202 = scalar_lea.vmem [#allocation3], %s201
        %p203 = pneg %p40
        %p204 = pneg %p37
        %p205 = pneg %p61
        %p206 = pneg %p58
        %p207 = pneg %p87
        %p208 = pneg %p84
        %p209 = scmp.lt.s32.totalorder %s19, 1
        %s210 = scalar_select %p209, %s19, 1
        %s211 = smul.addr %s210, 2
        %s212 = smul.addr %s211, 4
        %s213 = scalar_lea.vmem %s2, %s212
        %p214 = pneg %p113
        %p215 = pneg %p110
        %p216 = scmp.lt.s32.totalorder %s19, 1
        %s217 = scalar_select %p216, %s19, 1
        %s218 = smul.addr %s217, 4
        %s219 = scalar_lea.vmem %s3, %s218
        %p220 = pneg %p139
        %p221 = pneg %p136
        %p222 = scmp.lt.s32.totalorder %s19, 1
        %s223 = scalar_select %p222, %s19, 1
        %s224 = smul.addr %s223, 4
        %s225 = scalar_lea.vmem %s4, %s224
        %p226 = scmp.lt.s32.totalorder %s19, 1
        %s227 = scalar_select %p226, %s19, 1
        %s228 = smul.addr %s227, 2
        %s229 = smul.addr %s228, 4
        %s230 = scalar_lea.vmem %s2, %s229
        %p231 = scmp.lt.s32.totalorder %s19, 1
        %s232 = scalar_select %p231, %s19, 1
        %s233 = smul.addr %s232, 4
        %s234 = scalar_lea.vmem %s3, %s233
        %p235 = scmp.lt.s32.totalorder %s19, 1
        %s236 = scalar_select %p235, %s19, 1
        %s237 = smul.addr %s236, 4
        %s238 = scalar_lea.vmem %s4, %s237
        %vm239 = vcmask 146432
        %240 = vst.msk [vmem:[#allocation2] sm:$0xff] %vm239, 0.0
        %241 = vst.msk [vmem:[#allocation2 + $0x8] sm:$0xff] %vm239, 0.0
        %vm242 = vcmask 140288
        %243 = vst.msk [vmem:[#allocation2 + $0x10] sm:$0x3] %vm242, 0.0
        %244 = vst.msk [vmem:[#allocation2 + $0x18] sm:$0xff] %vm239, 0.0
        %245 = vst.msk [vmem:[#allocation2 + $0x20] sm:$0xff] %vm239, 0.0
        %246 = vst.msk [vmem:[#allocation2 + $0x28] sm:$0x3] %vm242, 0.0
        %247 = vst.msk [vmem:[#allocation2 + $0x30] sm:$0xff] %vm239, 0.0
        %248 = vst.msk [vmem:[#allocation2 + $0x38] sm:$0xff] %vm239, 0.0
        %249 = vst.msk [vmem:[#allocation2 + $0x40] sm:$0x3] %vm242, 0.0
        %250 = vst.msk [vmem:[#allocation2 + $0x48] sm:$0xff] %vm239, 0.0
        %251 = vst.msk [vmem:[#allocation2 + $0x50] sm:$0xff] %vm239, 0.0
        %252 = vst.msk [vmem:[#allocation2 + $0x58] sm:$0x3] %vm242, 0.0
        %v253 = vld [vmem:[%s193] sm:$0xff]
        %v254 = vld [vmem:[%s193 + $0x8] sm:$0xff]
        %v255 = vld [vmem:[%s193 + $0x10] sm:$0xff]
        %v256 = vld [vmem:[%s193 + $0x18] sm:$0xff]
        %v257 = vld [vmem:[%s193 + $0x20] sm:$0xff]
        %v258 = vld [vmem:[%s193 + $0x28] sm:$0xff]
        %v259 = vld [vmem:[%s193 + $0x30] sm:$0xff]
        %v260 = vld [vmem:[%s193 + $0x38] sm:$0xff]
        %269 = vrot.lane.b32.xlu0 %v253, 1
        %v270 = vpop.permute.xlu0 %269
        %271 = vrot.lane.b32.xlu0 %v254, 1
        %v272 = vpop.permute.xlu0 %271
        %273 = vrot.lane.b32.xlu0 %v255, 1
        %v274 = vpop.permute.xlu0 %273
        %275 = vrot.lane.b32.xlu0 %v256, 1
        %v276 = vpop.permute.xlu0 %275
        %277 = vrot.lane.b32.xlu0 %v257, 1
        %v278 = vpop.permute.xlu0 %277
        %279 = vrot.lane.b32.xlu0 %v258, 1
        %v280 = vpop.permute.xlu0 %279
        %281 = vrot.lane.b32.xlu0 %v259, 1
        %v282 = vpop.permute.xlu0 %281
        %283 = vrot.lane.b32.xlu0 %v260, 1
        %v284 = vpop.permute.xlu0 %283
        %vm293 = vcmask 138248
        %294 = vst.msk [vmem:[#allocation2 + $0x1] sm:$0xff] %vm293, %v270
        %295 = vst.msk [vmem:[#allocation2 + $0x9] sm:$0xff] %vm293, %v272
        %296 = vst.msk [vmem:[#allocation2 + $0x19] sm:$0xff] %vm293, %v274
        %297 = vst.msk [vmem:[#allocation2 + $0x21] sm:$0xff] %vm293, %v276
        %298 = vst.msk [vmem:[#allocation2 + $0x31] sm:$0xff] %vm293, %v278
        %299 = vst.msk [vmem:[#allocation2 + $0x39] sm:$0xff] %vm293, %v280
        %300 = vst.msk [vmem:[#allocation2 + $0x49] sm:$0xff] %vm293, %v282
        %301 = vst.msk [vmem:[#allocation2 + $0x51] sm:$0xff] %vm293, %v284
        %v302 = vld [vmem:[#allocation2] sm:$0xff]
        %v303 = vld [vmem:[#allocation2 + $0x8] sm:$0xff]
        %v304 = vld [vmem:[#allocation2 + $0x10] sm:$0x3]
        %v305 = vld [vmem:[#allocation2 + $0x18] sm:$0xff]
        %v306 = vld [vmem:[#allocation2 + $0x20] sm:$0xff]
        %v307 = vld [vmem:[#allocation2 + $0x28] sm:$0x3]
        %v308 = vld [vmem:[#allocation2 + $0x30] sm:$0xff]
        %v309 = vld [vmem:[#allocation2 + $0x38] sm:$0xff]
        %v310 = vld [vmem:[#allocation2 + $0x40] sm:$0x3]
        %v311 = vld [vmem:[#allocation2 + $0x48] sm:$0xff]
        %v312 = vld [vmem:[#allocation2 + $0x50] sm:$0xff]
        %v313 = vld [vmem:[#allocation2 + $0x58] sm:$0x3]
        %v314 = vld [vmem:[%s1] sm:$0xf]
        %v317 = vunpack.c.l.s4 1966171168
        %v318 = vunpack.c.0.s8 %v317
        %v319 = vlaneseq
        %v320 = vshrl.u32 %v319, 7
        %v321 = vsub.s32 %v318, %v320
        %v322 = vrot.slane %v314, %v321
        %v323 = vcombine.high %v322, %v322
        %v325 = vunpack.c.l.s4 1966171168
        %v326 = vunpack.c.0.s8 %v325
        %v327 = vlaneseq
        %v328 = vshrl.u32 %v327, 7
        %v329 = vsub.s32 %v326, %v328
        %v330 = vrot.slane %v322, %v329
        %v332 = vunpack.c.l.s4 1966171168
        %v333 = vunpack.c.0.s8 %v332
        %v334 = vlaneseq
        %v335 = vshrl.u32 %v334, 7
        %v336 = vsub.s32 %v333, %v335
        %v337 = vrot.slane %v323, %v336
        %v338 = vcombine.high %v330, %v330
        %v339 = vcombine.high %v337, %v337
        %v340 = vlaneseq
        %v341 = vshrl.u32 %v340, 7
        %v342 = vsub.s32 0, %v341
        %v343 = vrot.slane %v330, %v342
        %v344 = vlaneseq
        %v345 = vshrl.u32 %v344, 7
        %v346 = vsub.s32 0, %v345
        %v347 = vrot.slane %v337, %v346
        %v348 = vlaneseq
        %v349 = vshrl.u32 %v348, 7
        %v350 = vsub.s32 0, %v349
        %v351 = vrot.slane %v338, %v350
        %v352 = vlaneseq
        %v353 = vshrl.u32 %v352, 7
        %v354 = vsub.s32 0, %v353
        %v355 = vrot.slane %v339, %v354
        %356 = vset.pattern.permute.xlu0 0
        %357 = vperm.xlu0 %356, %v343
        %v358 = vpop.permute.xlu0 %357
        %360 = vset.pattern.permute.xlu0 0
        %361 = vperm.xlu0 %360, %v347
        %v362 = vpop.permute.xlu0 %361
        %364 = vset.pattern.permute.xlu0 0
        %365 = vperm.xlu0 %364, %v351
        %v366 = vpop.permute.xlu0 %365
        %368 = vset.pattern.permute.xlu0 0
        %369 = vperm.xlu0 %368, %v355
        %v370 = vpop.permute.xlu0 %369
        %v372 = vmul.f32 %v302, %v358
        %v373 = vmul.f32 %v303, %v358
        %v374 = vmul.f32 %v305, %v362
        %v375 = vmul.f32 %v306, %v362
        %v376 = vmul.f32 %v308, %v366
        %v377 = vmul.f32 %v309, %v366
        %v378 = vmul.f32 %v311, %v370
        %v379 = vmul.f32 %v312, %v370
        %380 = vset.pattern.permute.xlu0 1
        %381 = vperm.xlu0 %380, %v343
        %v382 = vpop.permute.xlu0 %381
        %384 = vset.pattern.permute.xlu0 1
        %385 = vperm.xlu0 %384, %v347
        %v386 = vpop.permute.xlu0 %385
        %388 = vset.pattern.permute.xlu0 1
        %389 = vperm.xlu0 %388, %v351
        %v390 = vpop.permute.xlu0 %389
        %392 = vset.pattern.permute.xlu0 1
        %393 = vperm.xlu0 %392, %v355
        %v394 = vpop.permute.xlu0 %393
        %v396 = vmul.f32 %v302, %v382
        %v397 = vmul.f32 %v303, %v382
        %v398 = vmul.f32 %v305, %v386
        %v399 = vmul.f32 %v306, %v386
        %v400 = vmul.f32 %v308, %v390
        %v401 = vmul.f32 %v309, %v390
        %v402 = vmul.f32 %v311, %v394
        %v403 = vmul.f32 %v312, %v394
        %412 = vrot.lane.b32.xlu0 %v396, 127
        %v413 = vpop.permute.xlu0 %412
        %414 = vrot.lane.b32.xlu0 %v397, 127
        %v415 = vpop.permute.xlu0 %414
        %416 = vrot.lane.b32.xlu0 %v398, 127
        %v417 = vpop.permute.xlu0 %416
        %418 = vrot.lane.b32.xlu0 %v399, 127
        %v419 = vpop.permute.xlu0 %418
        %420 = vrot.lane.b32.xlu0 %v400, 127
        %v421 = vpop.permute.xlu0 %420
        %422 = vrot.lane.b32.xlu0 %v401, 127
        %v423 = vpop.permute.xlu0 %422
        %424 = vrot.lane.b32.xlu0 %v402, 127
        %v425 = vpop.permute.xlu0 %424
        %426 = vrot.lane.b32.xlu0 %v403, 127
        %v427 = vpop.permute.xlu0 %426
        %v436 = vadd.f32 %v372, %v413
        %v437 = vadd.f32 %v373, %v415
        %v438 = vadd.f32 %v374, %v417
        %v439 = vadd.f32 %v375, %v419
        %v440 = vadd.f32 %v376, %v421
        %v441 = vadd.f32 %v377, %v423
        %v442 = vadd.f32 %v378, %v425
        %v443 = vadd.f32 %v379, %v427
        %444 = vset.pattern.permute.xlu0 2
        %445 = vperm.xlu0 %444, %v343
        %v446 = vpop.permute.xlu0 %445
        %448 = vset.pattern.permute.xlu0 2
        %449 = vperm.xlu0 %448, %v347
        %v450 = vpop.permute.xlu0 %449
        %452 = vset.pattern.permute.xlu0 2
        %453 = vperm.xlu0 %452, %v351
        %v454 = vpop.permute.xlu0 %453
        %456 = vset.pattern.permute.xlu0 2
        %457 = vperm.xlu0 %456, %v355
        %v458 = vpop.permute.xlu0 %457
        %v460 = vmul.f32 %v302, %v446
        %v461 = vmul.f32 %v303, %v446
        %v462 = vmul.f32 %v305, %v450
        %v463 = vmul.f32 %v306, %v450
        %v464 = vmul.f32 %v308, %v454
        %v465 = vmul.f32 %v309, %v454
        %v466 = vmul.f32 %v311, %v458
        %v467 = vmul.f32 %v312, %v458
        %476 = vrot.lane.b32.xlu0 %v460, 126
        %v477 = vpop.permute.xlu0 %476
        %478 = vrot.lane.b32.xlu0 %v461, 126
        %v479 = vpop.permute.xlu0 %478
        %480 = vrot.lane.b32.xlu0 %v462, 126
        %v481 = vpop.permute.xlu0 %480
        %482 = vrot.lane.b32.xlu0 %v463, 126
        %v483 = vpop.permute.xlu0 %482
        %484 = vrot.lane.b32.xlu0 %v464, 126
        %v485 = vpop.permute.xlu0 %484
        %486 = vrot.lane.b32.xlu0 %v465, 126
        %v487 = vpop.permute.xlu0 %486
        %488 = vrot.lane.b32.xlu0 %v466, 126
        %v489 = vpop.permute.xlu0 %488
        %490 = vrot.lane.b32.xlu0 %v467, 126
        %v491 = vpop.permute.xlu0 %490
        %v500 = vadd.f32 %v436, %v477
        %v501 = vadd.f32 %v437, %v479
        %v502 = vadd.f32 %v438, %v481
        %v503 = vadd.f32 %v439, %v483
        %v504 = vadd.f32 %v440, %v485
        %v505 = vadd.f32 %v441, %v487
        %v506 = vadd.f32 %v442, %v489
        %v507 = vadd.f32 %v443, %v491
        %508 = vset.pattern.permute.xlu0 3
        %509 = vperm.xlu0 %508, %v343
        %v510 = vpop.permute.xlu0 %509
        %512 = vset.pattern.permute.xlu0 3
        %513 = vperm.xlu0 %512, %v347
        %v514 = vpop.permute.xlu0 %513
        %516 = vset.pattern.permute.xlu0 3
        %517 = vperm.xlu0 %516, %v351
        %v518 = vpop.permute.xlu0 %517
        %520 = vset.pattern.permute.xlu0 3
        %521 = vperm.xlu0 %520, %v355
        %v522 = vpop.permute.xlu0 %521
        %v524 = vmul.f32 %v302, %v510
        %v525 = vmul.f32 %v303, %v510
        %v526 = vmul.f32 %v304, %v510
        %v527 = vmul.f32 %v305, %v514
        %v528 = vmul.f32 %v306, %v514
        %v529 = vmul.f32 %v307, %v514
        %v530 = vmul.f32 %v308, %v518
        %v531 = vmul.f32 %v309, %v518
        %v532 = vmul.f32 %v310, %v518
        %v533 = vmul.f32 %v311, %v522
        %v534 = vmul.f32 %v312, %v522
        %v535 = vmul.f32 %v313, %v522
        %vm548 = vcmask 1046528
        %v549 = vrot.slane %v524, 1
        %v550 = vrot.slane %v525, 1
        %v551 = vsel %vm548, %v549, %v550
        %v552 = vrot.slane %v526, 1
        %v553 = vsel %vm548, %v550, %v552
        %v554 = vrot.slane %v527, 1
        %v555 = vrot.slane %v528, 1
        %v556 = vsel %vm548, %v554, %v555
        %v557 = vrot.slane %v529, 1
        %v558 = vsel %vm548, %v555, %v557
        %v559 = vrot.slane %v530, 1
        %v560 = vrot.slane %v531, 1
        %v561 = vsel %vm548, %v559, %v560
        %v562 = vrot.slane %v532, 1
        %v563 = vsel %vm548, %v560, %v562
        %v564 = vrot.slane %v533, 1
        %v565 = vrot.slane %v534, 1
        %v566 = vsel %vm548, %v564, %v565
        %v567 = vrot.slane %v535, 1
        %v568 = vsel %vm548, %v565, %v567
        %v577 = vadd.f32 %v500, %v551
        %v578 = vadd.f32 %v501, %v553
        %v579 = vadd.f32 %v502, %v556
        %v580 = vadd.f32 %v503, %v558
        %v581 = vadd.f32 %v504, %v561
        %v582 = vadd.f32 %v505, %v563
        %v583 = vadd.f32 %v506, %v566
        %v584 = vadd.f32 %v507, %v568
        %585 = vset.pattern.permute.xlu0 4
        %586 = vperm.xlu0 %585, %v343
        %v587 = vpop.permute.xlu0 %586
        %589 = vset.pattern.permute.xlu0 4
        %590 = vperm.xlu0 %589, %v347
        %v591 = vpop.permute.xlu0 %590
        %593 = vset.pattern.permute.xlu0 4
        %594 = vperm.xlu0 %593, %v351
        %v595 = vpop.permute.xlu0 %594
        %597 = vset.pattern.permute.xlu0 4
        %598 = vperm.xlu0 %597, %v355
        %v599 = vpop.permute.xlu0 %598
        %v601 = vmul.f32 %v302, %v587
        %v602 = vmul.f32 %v303, %v587
        %v603 = vmul.f32 %v304, %v587
        %v604 = vmul.f32 %v305, %v591
        %v605 = vmul.f32 %v306, %v591
        %v606 = vmul.f32 %v307, %v591
        %v607 = vmul.f32 %v308, %v595
        %v608 = vmul.f32 %v309, %v595
        %v609 = vmul.f32 %v310, %v595
        %v610 = vmul.f32 %v311, %v599
        %v611 = vmul.f32 %v312, %v599
        %v612 = vmul.f32 %v313, %v599
        %v625 = vrot.slane %v601, 1
        %v626 = vrot.slane %v602, 1
        %v627 = vsel %vm548, %v625, %v626
        %v628 = vrot.slane %v603, 1
        %v629 = vsel %vm548, %v626, %v628
        %v630 = vrot.slane %v604, 1
        %v631 = vrot.slane %v605, 1
        %v632 = vsel %vm548, %v630, %v631
        %v633 = vrot.slane %v606, 1
        %v634 = vsel %vm548, %v631, %v633
        %v635 = vrot.slane %v607, 1
        %v636 = vrot.slane %v608, 1
        %v637 = vsel %vm548, %v635, %v636
        %v638 = vrot.slane %v609, 1
        %v639 = vsel %vm548, %v636, %v638
        %v640 = vrot.slane %v610, 1
        %v641 = vrot.slane %v611, 1
        %v642 = vsel %vm548, %v640, %v641
        %v643 = vrot.slane %v612, 1
        %v644 = vsel %vm548, %v641, %v643
        %645 = vrot.lane.b32.xlu0 %v627, 127
        %v646 = vpop.permute.xlu0 %645
        %647 = vrot.lane.b32.xlu0 %v629, 127
        %v648 = vpop.permute.xlu0 %647
        %649 = vrot.lane.b32.xlu0 %v632, 127
        %v650 = vpop.permute.xlu0 %649
        %651 = vrot.lane.b32.xlu0 %v634, 127
        %v652 = vpop.permute.xlu0 %651
        %653 = vrot.lane.b32.xlu0 %v637, 127
        %v654 = vpop.permute.xlu0 %653
        %655 = vrot.lane.b32.xlu0 %v639, 127
        %v656 = vpop.permute.xlu0 %655
        %657 = vrot.lane.b32.xlu0 %v642, 127
        %v658 = vpop.permute.xlu0 %657
        %659 = vrot.lane.b32.xlu0 %v644, 127
        %v660 = vpop.permute.xlu0 %659
        %v669 = vadd.f32 %v577, %v646
        %v670 = vadd.f32 %v578, %v648
        %v671 = vadd.f32 %v579, %v650
        %v672 = vadd.f32 %v580, %v652
        %v673 = vadd.f32 %v581, %v654
        %v674 = vadd.f32 %v582, %v656
        %v675 = vadd.f32 %v583, %v658
        %v676 = vadd.f32 %v584, %v660
        %677 = vset.pattern.permute.xlu0 5
        %678 = vperm.xlu0 %677, %v343
        %v679 = vpop.permute.xlu0 %678
        %681 = vset.pattern.permute.xlu0 5
        %682 = vperm.xlu0 %681, %v347
        %v683 = vpop.permute.xlu0 %682
        %685 = vset.pattern.permute.xlu0 5
        %686 = vperm.xlu0 %685, %v351
        %v687 = vpop.permute.xlu0 %686
        %689 = vset.pattern.permute.xlu0 5
        %690 = vperm.xlu0 %689, %v355
        %v691 = vpop.permute.xlu0 %690
        %v693 = vmul.f32 %v302, %v679
        %v694 = vmul.f32 %v303, %v679
        %v695 = vmul.f32 %v304, %v679
        %v696 = vmul.f32 %v305, %v683
        %v697 = vmul.f32 %v306, %v683
        %v698 = vmul.f32 %v307, %v683
        %v699 = vmul.f32 %v308, %v687
        %v700 = vmul.f32 %v309, %v687
        %v701 = vmul.f32 %v310, %v687
        %v702 = vmul.f32 %v311, %v691
        %v703 = vmul.f32 %v312, %v691
        %v704 = vmul.f32 %v313, %v691
        %v717 = vrot.slane %v693, 1
        %v718 = vrot.slane %v694, 1
        %v719 = vsel %vm548, %v717, %v718
        %v720 = vrot.slane %v695, 1
        %v721 = vsel %vm548, %v718, %v720
        %v722 = vrot.slane %v696, 1
        %v723 = vrot.slane %v697, 1
        %v724 = vsel %vm548, %v722, %v723
        %v725 = vrot.slane %v698, 1
        %v726 = vsel %vm548, %v723, %v725
        %v727 = vrot.slane %v699, 1
        %v728 = vrot.slane %v700, 1
        %v729 = vsel %vm548, %v727, %v728
        %v730 = vrot.slane %v701, 1
        %v731 = vsel %vm548, %v728, %v730
        %v732 = vrot.slane %v702, 1
        %v733 = vrot.slane %v703, 1
        %v734 = vsel %vm548, %v732, %v733
        %v735 = vrot.slane %v704, 1
        %v736 = vsel %vm548, %v733, %v735
        %737 = vrot.lane.b32.xlu0 %v719, 126
        %v738 = vpop.permute.xlu0 %737
        %739 = vrot.lane.b32.xlu0 %v721, 126
        %v740 = vpop.permute.xlu0 %739
        %741 = vrot.lane.b32.xlu0 %v724, 126
        %v742 = vpop.permute.xlu0 %741
        %743 = vrot.lane.b32.xlu0 %v726, 126
        %v744 = vpop.permute.xlu0 %743
        %745 = vrot.lane.b32.xlu0 %v729, 126
        %v746 = vpop.permute.xlu0 %745
        %747 = vrot.lane.b32.xlu0 %v731, 126
        %v748 = vpop.permute.xlu0 %747
        %749 = vrot.lane.b32.xlu0 %v734, 126
        %v750 = vpop.permute.xlu0 %749
        %751 = vrot.lane.b32.xlu0 %v736, 126
        %v752 = vpop.permute.xlu0 %751
        %v761 = vadd.f32 %v669, %v738
        %v762 = vadd.f32 %v670, %v740
        %v763 = vadd.f32 %v671, %v742
        %v764 = vadd.f32 %v672, %v744
        %v765 = vadd.f32 %v673, %v746
        %v766 = vadd.f32 %v674, %v748
        %v767 = vadd.f32 %v675, %v750
        %v768 = vadd.f32 %v676, %v752
        %769 = vset.pattern.permute.xlu0 6
        %770 = vperm.xlu0 %769, %v343
        %v771 = vpop.permute.xlu0 %770
        %773 = vset.pattern.permute.xlu0 6
        %774 = vperm.xlu0 %773, %v347
        %v775 = vpop.permute.xlu0 %774
        %777 = vset.pattern.permute.xlu0 6
        %778 = vperm.xlu0 %777, %v351
        %v779 = vpop.permute.xlu0 %778
        %781 = vset.pattern.permute.xlu0 6
        %782 = vperm.xlu0 %781, %v355
        %v783 = vpop.permute.xlu0 %782
        %v785 = vmul.f32 %v302, %v771
        %v786 = vmul.f32 %v303, %v771
        %v787 = vmul.f32 %v304, %v771
        %v788 = vmul.f32 %v305, %v775
        %v789 = vmul.f32 %v306, %v775
        %v790 = vmul.f32 %v307, %v775
        %v791 = vmul.f32 %v308, %v779
        %v792 = vmul.f32 %v309, %v779
        %v793 = vmul.f32 %v310, %v779
        %v794 = vmul.f32 %v311, %v783
        %v795 = vmul.f32 %v312, %v783
        %v796 = vmul.f32 %v313, %v783
        %vm809 = vcmask 1045504
        %v810 = vrot.slane %v785, 2
        %v811 = vrot.slane %v786, 2
        %v812 = vsel %vm809, %v810, %v811
        %v813 = vrot.slane %v787, 2
        %v814 = vsel %vm809, %v811, %v813
        %v815 = vrot.slane %v788, 2
        %v816 = vrot.slane %v789, 2
        %v817 = vsel %vm809, %v815, %v816
        %v818 = vrot.slane %v790, 2
        %v819 = vsel %vm809, %v816, %v818
        %v820 = vrot.slane %v791, 2
        %v821 = vrot.slane %v792, 2
        %v822 = vsel %vm809, %v820, %v821
        %v823 = vrot.slane %v793, 2
        %v824 = vsel %vm809, %v821, %v823
        %v825 = vrot.slane %v794, 2
        %v826 = vrot.slane %v795, 2
        %v827 = vsel %vm809, %v825, %v826
        %v828 = vrot.slane %v796, 2
        %v829 = vsel %vm809, %v826, %v828
        %v838 = vadd.f32 %v761, %v812
        %v839 = vadd.f32 %v762, %v814
        %v840 = vadd.f32 %v763, %v817
        %v841 = vadd.f32 %v764, %v819
        %v842 = vadd.f32 %v765, %v822
        %v843 = vadd.f32 %v766, %v824
        %v844 = vadd.f32 %v767, %v827
        %v845 = vadd.f32 %v768, %v829
        %846 = vset.pattern.permute.xlu0 7
        %847 = vperm.xlu0 %846, %v343
        %v848 = vpop.permute.xlu0 %847
        %850 = vset.pattern.permute.xlu0 7
        %851 = vperm.xlu0 %850, %v347
        %v852 = vpop.permute.xlu0 %851
        %854 = vset.pattern.permute.xlu0 7
        %855 = vperm.xlu0 %854, %v351
        %v856 = vpop.permute.xlu0 %855
        %858 = vset.pattern.permute.xlu0 7
        %859 = vperm.xlu0 %858, %v355
        %v860 = vpop.permute.xlu0 %859
        %v862 = vmul.f32 %v302, %v848
        %v863 = vmul.f32 %v303, %v848
        %v864 = vmul.f32 %v304, %v848
        %v865 = vmul.f32 %v305, %v852
        %v866 = vmul.f32 %v306, %v852
        %v867 = vmul.f32 %v307, %v852
        %v868 = vmul.f32 %v308, %v856
        %v869 = vmul.f32 %v309, %v856
        %v870 = vmul.f32 %v310, %v856
        %v871 = vmul.f32 %v311, %v860
        %v872 = vmul.f32 %v312, %v860
        %v873 = vmul.f32 %v313, %v860
        %v886 = vrot.slane %v862, 2
        %v887 = vrot.slane %v863, 2
        %v888 = vsel %vm809, %v886, %v887
        %v889 = vrot.slane %v864, 2
        %v890 = vsel %vm809, %v887, %v889
        %v891 = vrot.slane %v865, 2
        %v892 = vrot.slane %v866, 2
        %v893 = vsel %vm809, %v891, %v892
        %v894 = vrot.slane %v867, 2
        %v895 = vsel %vm809, %v892, %v894
        %v896 = vrot.slane %v868, 2
        %v897 = vrot.slane %v869, 2
        %v898 = vsel %vm809, %v896, %v897
        %v899 = vrot.slane %v870, 2
        %v900 = vsel %vm809, %v897, %v899
        %v901 = vrot.slane %v871, 2
        %v902 = vrot.slane %v872, 2
        %v903 = vsel %vm809, %v901, %v902
        %v904 = vrot.slane %v873, 2
        %v905 = vsel %vm809, %v902, %v904
        %906 = vrot.lane.b32.xlu0 %v888, 127
        %v907 = vpop.permute.xlu0 %906
        %908 = vrot.lane.b32.xlu0 %v890, 127
        %v909 = vpop.permute.xlu0 %908
        %910 = vrot.lane.b32.xlu0 %v893, 127
        %v911 = vpop.permute.xlu0 %910
        %912 = vrot.lane.b32.xlu0 %v895, 127
        %v913 = vpop.permute.xlu0 %912
        %914 = vrot.lane.b32.xlu0 %v898, 127
        %v915 = vpop.permute.xlu0 %914
        %916 = vrot.lane.b32.xlu0 %v900, 127
        %v917 = vpop.permute.xlu0 %916
        %918 = vrot.lane.b32.xlu0 %v903, 127
        %v919 = vpop.permute.xlu0 %918
        %920 = vrot.lane.b32.xlu0 %v905, 127
        %v921 = vpop.permute.xlu0 %920
        %v930 = vadd.f32 %v838, %v907
        %v931 = vadd.f32 %v839, %v909
        %v932 = vadd.f32 %v840, %v911
        %v933 = vadd.f32 %v841, %v913
        %v934 = vadd.f32 %v842, %v915
        %v935 = vadd.f32 %v843, %v917
        %v936 = vadd.f32 %v844, %v919
        %v937 = vadd.f32 %v845, %v921
        %938 = vset.pattern.permute.xlu0 8
        %939 = vperm.xlu0 %938, %v343
        %v940 = vpop.permute.xlu0 %939
        %942 = vset.pattern.permute.xlu0 8
        %943 = vperm.xlu0 %942, %v347
        %v944 = vpop.permute.xlu0 %943
        %946 = vset.pattern.permute.xlu0 8
        %947 = vperm.xlu0 %946, %v351
        %v948 = vpop.permute.xlu0 %947
        %950 = vset.pattern.permute.xlu0 8
        %951 = vperm.xlu0 %950, %v355
        %v952 = vpop.permute.xlu0 %951
        %v954 = vmul.f32 %v302, %v940
        %v955 = vmul.f32 %v303, %v940
        %v956 = vmul.f32 %v304, %v940
        %v957 = vmul.f32 %v305, %v944
        %v958 = vmul.f32 %v306, %v944
        %v959 = vmul.f32 %v307, %v944
        %v960 = vmul.f32 %v308, %v948
        %v961 = vmul.f32 %v309, %v948
        %v962 = vmul.f32 %v310, %v948
        %v963 = vmul.f32 %v311, %v952
        %v964 = vmul.f32 %v312, %v952
        %v965 = vmul.f32 %v313, %v952
        %v978 = vrot.slane %v954, 2
        %v979 = vrot.slane %v955, 2
        %v980 = vsel %vm809, %v978, %v979
        %v981 = vrot.slane %v956, 2
        %v982 = vsel %vm809, %v979, %v981
        %v983 = vrot.slane %v957, 2
        %v984 = vrot.slane %v958, 2
        %v985 = vsel %vm809, %v983, %v984
        %v986 = vrot.slane %v959, 2
        %v987 = vsel %vm809, %v984, %v986
        %v988 = vrot.slane %v960, 2
        %v989 = vrot.slane %v961, 2
        %v990 = vsel %vm809, %v988, %v989
        %v991 = vrot.slane %v962, 2
        %v992 = vsel %vm809, %v989, %v991
        %v993 = vrot.slane %v963, 2
        %v994 = vrot.slane %v964, 2
        %v995 = vsel %vm809, %v993, %v994
        %v996 = vrot.slane %v965, 2
        %v997 = vsel %vm809, %v994, %v996
        %998 = vrot.lane.b32.xlu0 %v980, 126
        %v999 = vpop.permute.xlu0 %998
        %1000 = vrot.lane.b32.xlu0 %v982, 126
        %v1001 = vpop.permute.xlu0 %1000
        %1002 = vrot.lane.b32.xlu0 %v985, 126
        %v1003 = vpop.permute.xlu0 %1002
        %1004 = vrot.lane.b32.xlu0 %v987, 126
        %v1005 = vpop.permute.xlu0 %1004
        %1006 = vrot.lane.b32.xlu0 %v990, 126
        %v1007 = vpop.permute.xlu0 %1006
        %1008 = vrot.lane.b32.xlu0 %v992, 126
        %v1009 = vpop.permute.xlu0 %1008
        %1010 = vrot.lane.b32.xlu0 %v995, 126
        %v1011 = vpop.permute.xlu0 %1010
        %1012 = vrot.lane.b32.xlu0 %v997, 126
        %v1013 = vpop.permute.xlu0 %1012
        %v1022 = vadd.f32 %v930, %v999
        %v1023 = vadd.f32 %v931, %v1001
        %v1024 = vadd.f32 %v932, %v1003
        %v1025 = vadd.f32 %v933, %v1005
        %v1026 = vadd.f32 %v934, %v1007
        %v1027 = vadd.f32 %v935, %v1009
        %v1028 = vadd.f32 %v936, %v1011
        %v1029 = vadd.f32 %v937, %v1013
        %v1030 = vcombine.low %v1022, %v1026
        %v1031 = vcombine.high %v1022, %v1026
        %v1033 = vunpack.c.l.s4 1983009808
        %v1034 = vunpack.c.0.s8 %v1033
        %v1035 = vlaneseq
        %v1036 = vshrl.u32 %v1035, 7
        %v1037 = vsub.s32 %v1034, %v1036
        %v1038 = vrot.slane %v1030, %v1037
        %v1040 = vunpack.c.l.s4 1983009808
        %v1041 = vunpack.c.0.s8 %v1040
        %v1042 = vlaneseq
        %v1043 = vshrl.u32 %v1042, 7
        %v1044 = vsub.s32 %v1041, %v1043
        %v1045 = vrot.slane %v1031, %v1044
        %v1046 = vcombine.low %v1024, %v1028
        %v1047 = vcombine.high %v1024, %v1028
        %v1049 = vunpack.c.l.s4 1983009808
        %v1050 = vunpack.c.0.s8 %v1049
        %v1051 = vlaneseq
        %v1052 = vshrl.u32 %v1051, 7
        %v1053 = vsub.s32 %v1050, %v1052
        %v1054 = vrot.slane %v1046, %v1053
        %v1056 = vunpack.c.l.s4 1983009808
        %v1057 = vunpack.c.0.s8 %v1056
        %v1058 = vlaneseq
        %v1059 = vshrl.u32 %v1058, 7
        %v1060 = vsub.s32 %v1057, %v1059
        %v1061 = vrot.slane %v1047, %v1060
        %v1062 = vcombine.low %v1038, %v1054
        %v1063 = vcombine.high %v1038, %v1054
        %v1065 = vunpack.c.l.s4 1934713408
        %v1066 = vunpack.c.0.s8 %v1065
        %v1067 = vlaneseq
        %v1068 = vshrl.u32 %v1067, 7
        %v1069 = vsub.s32 %v1066, %v1068
        %v1070 = vrot.slane %v1062, %v1069
        %v1072 = vunpack.c.l.s4 1934713408
        %v1073 = vunpack.c.0.s8 %v1072
        %v1074 = vlaneseq
        %v1075 = vshrl.u32 %v1074, 7
        %v1076 = vsub.s32 %v1073, %v1075
        %v1077 = vrot.slane %v1063, %v1076
        %v1078 = vcombine.low %v1045, %v1061
        %v1079 = vcombine.high %v1045, %v1061
        %v1081 = vunpack.c.l.s4 1934713408
        %v1082 = vunpack.c.0.s8 %v1081
        %v1083 = vlaneseq
        %v1084 = vshrl.u32 %v1083, 7
        %v1085 = vsub.s32 %v1082, %v1084
        %v1086 = vrot.slane %v1078, %v1085
        %v1088 = vunpack.c.l.s4 1934713408
        %v1089 = vunpack.c.0.s8 %v1088
        %v1090 = vlaneseq
        %v1091 = vshrl.u32 %v1090, 7
        %v1092 = vsub.s32 %v1089, %v1091
        %v1093 = vrot.slane %v1079, %v1092
        %v1094 = vcombine.high %v1070, 0.0
        %v1095 = vcombine.high %v1077, 0.0
        %v1096 = vcombine.high %v1086, 0.0
        %v1097 = vcombine.high %v1093, 0.0
        %v1098 = vcombine.low %v1023, %v1027
        %v1099 = vcombine.high %v1023, %v1027
        %v1101 = vunpack.c.l.s4 1983009808
        %v1102 = vunpack.c.0.s8 %v1101
        %v1103 = vlaneseq
        %v1104 = vshrl.u32 %v1103, 7
        %v1105 = vsub.s32 %v1102, %v1104
        %v1106 = vrot.slane %v1098, %v1105
        %v1108 = vunpack.c.l.s4 1983009808
        %v1109 = vunpack.c.0.s8 %v1108
        %v1110 = vlaneseq
        %v1111 = vshrl.u32 %v1110, 7
        %v1112 = vsub.s32 %v1109, %v1111
        %v1113 = vrot.slane %v1099, %v1112
        %v1114 = vcombine.low %v1025, %v1029
        %v1115 = vcombine.high %v1025, %v1029
        %v1117 = vunpack.c.l.s4 1983009808
        %v1118 = vunpack.c.0.s8 %v1117
        %v1119 = vlaneseq
        %v1120 = vshrl.u32 %v1119, 7
        %v1121 = vsub.s32 %v1118, %v1120
        %v1122 = vrot.slane %v1114, %v1121
        %v1124 = vunpack.c.l.s4 1983009808
        %v1125 = vunpack.c.0.s8 %v1124
        %v1126 = vlaneseq
        %v1127 = vshrl.u32 %v1126, 7
        %v1128 = vsub.s32 %v1125, %v1127
        %v1129 = vrot.slane %v1115, %v1128
        %v1130 = vcombine.low %v1106, %v1122
        %v1131 = vcombine.high %v1106, %v1122
        %v1133 = vunpack.c.l.s4 1934713408
        %v1134 = vunpack.c.0.s8 %v1133
        %v1135 = vlaneseq
        %v1136 = vshrl.u32 %v1135, 7
        %v1137 = vsub.s32 %v1134, %v1136
        %v1138 = vrot.slane %v1130, %v1137
        %v1140 = vunpack.c.l.s4 1934713408
        %v1141 = vunpack.c.0.s8 %v1140
        %v1142 = vlaneseq
        %v1143 = vshrl.u32 %v1142, 7
        %v1144 = vsub.s32 %v1141, %v1143
        %v1145 = vrot.slane %v1131, %v1144
        %v1146 = vcombine.low %v1113, %v1129
        %v1147 = vcombine.high %v1113, %v1129
        %v1149 = vunpack.c.l.s4 1934713408
        %v1150 = vunpack.c.0.s8 %v1149
        %v1151 = vlaneseq
        %v1152 = vshrl.u32 %v1151, 7
        %v1153 = vsub.s32 %v1150, %v1152
        %v1154 = vrot.slane %v1146, %v1153
        %v1156 = vunpack.c.l.s4 1934713408
        %v1157 = vunpack.c.0.s8 %v1156
        %v1158 = vlaneseq
        %v1159 = vshrl.u32 %v1158, 7
        %v1160 = vsub.s32 %v1157, %v1159
        %v1161 = vrot.slane %v1147, %v1160
        %v1162 = vcombine.high %v1138, 0.0
        %v1163 = vcombine.high %v1145, 0.0
        %v1164 = vcombine.high %v1154, 0.0
        %v1165 = vcombine.high %v1161, 0.0
        %1167 = vrot.lane.b32.xlu0 %v1094, 16
        %v1168 = vpop.permute.xlu0 %1167
        %1171 = vrot.lane.b32.xlu0 %v1077, 32
        %v1172 = vpop.permute.xlu0 %1171
        %1175 = vrot.lane.b32.xlu0 %v1095, 48
        %v1176 = vpop.permute.xlu0 %1175
        %1179 = vrot.lane.b32.xlu0 %v1086, 64
        %v1180 = vpop.permute.xlu0 %1179
        %1183 = vrot.lane.b32.xlu0 %v1096, 80
        %v1184 = vpop.permute.xlu0 %1183
        %1187 = vrot.lane.b32.xlu0 %v1093, 96
        %v1188 = vpop.permute.xlu0 %1187
        %1191 = vrot.lane.b32.xlu0 %v1097, 112
        %v1192 = vpop.permute.xlu0 %1191
        %1195 = vrot.lane.b32.xlu0 %v1162, 16
        %v1196 = vpop.permute.xlu0 %1195
        %1199 = vrot.lane.b32.xlu0 %v1145, 32
        %v1200 = vpop.permute.xlu0 %1199
        %1203 = vrot.lane.b32.xlu0 %v1163, 48
        %v1204 = vpop.permute.xlu0 %1203
        %1207 = vrot.lane.b32.xlu0 %v1154, 64
        %v1208 = vpop.permute.xlu0 %1207
        %1211 = vrot.lane.b32.xlu0 %v1164, 80
        %v1212 = vpop.permute.xlu0 %1211
        %1215 = vrot.lane.b32.xlu0 %v1161, 96
        %v1216 = vpop.permute.xlu0 %1215
        %1219 = vrot.lane.b32.xlu0 %v1165, 112
        %v1220 = vpop.permute.xlu0 %1219
        %vm1222 = vcmask 130048
        %v1223 = vsel %vm1222, %v1070, %v1168
        %vm1224 = vcmask 261120
        %v1225 = vsel %vm1224, %v1223, %v1172
        %vm1226 = vcmask 392192
        %v1227 = vsel %vm1226, %v1225, %v1176
        %vm1228 = vcmask 523264
        %v1229 = vsel %vm1228, %v1227, %v1180
        %vm1230 = vcmask 654336
        %v1231 = vsel %vm1230, %v1229, %v1184
        %vm1232 = vcmask 785408
        %v1233 = vsel %vm1232, %v1231, %v1188
        %vm1234 = vcmask 916480
        %v1235 = vsel %vm1234, %v1233, %v1192
        %v1236 = vsel %vm1222, %v1138, %v1196
        %v1237 = vsel %vm1224, %v1236, %v1200
        %v1238 = vsel %vm1226, %v1237, %v1204
        %v1239 = vsel %vm1228, %v1238, %v1208
        %v1240 = vsel %vm1230, %v1239, %v1212
        %v1241 = vsel %vm1232, %v1240, %v1216
        %v1242 = vsel %vm1234, %v1241, %v1220
        %v1245 = vcombine.low %v1235, %v1242
        %1247 = vst [vmem:[%s230] sm:$0xff] %v1245
        %vm1248 = vcmask 1043456
        %v1249 = vsel %vm1248, %v1235, 0.0
        %v1250 = vsel %vm1248, %v1242, 0.0
        %v1251 = vadd.f32 %v1249, %v1250
        %1252 = vadd.xlane.f32.xlu0 %v1251
        %v1253 = vpop.xlane.xlu0 %1252
        %vm1254 = vcmask 3072
        %1255 = vst.msk [vmem:[%s234] sm:$0xf] %vm1254, %v1253
        %v1256 = vmul.f32 %v1235, %v1235
        %v1257 = vmul.f32 %v1242, %v1242
        %v1258 = vsel %vm1248, %v1256, 0.0
        %v1259 = vsel %vm1248, %v1257, 0.0
        %v1260 = vadd.f32 %v1258, %v1259
        %1261 = vadd.xlane.f32.xlu0 %v1260
        %v1262 = vpop.xlane.xlu0 %1261
        %1263 = vst.msk [vmem:[%s238] sm:$0xf] %vm1254, %v1262
        %p1264 = scmp.lt.s32.totalorder %s19, 1
        %s1265 = scalar_select %p1264, %s19, 1
        %s1266 = smul.addr %s1265, 2
        %s1267 = smul.addr %s1266, 4
        %s1268 = scalar_lea.vmem %s2, %s1267
        %p1269 = scmp.lt.s32.totalorder %s19, 1
        %s1270 = scalar_select %p1269, %s19, 1
        %s1271 = smul.addr %s1270, 4
        %s1272 = scalar_lea.vmem %s3, %s1271
        %p1273 = scmp.lt.s32.totalorder %s19, 1
        %s1274 = scalar_select %p1273, %s19, 1
        %s1275 = smul.addr %s1274, 4
        %s1276 = scalar_lea.vmem %s4, %s1275
        // Predicated region
        $region33: #{conv_dw_block.3} parent=27 // pred_check
          %p1277 = pneg %p84
        $region34: #{conv_dw_block.3} parent=27 // pred_check_branch
          %1279 = sbr.rel (%p1277) target = $region36
        $region35: #{conv_dw_block.3} parent=27 // pred_region
          _
        $region36: #{conv_dw_block.3} parent=27 // pred_fallthru
          _
        // Predicated region
        $region37: #{conv_dw_block.3} parent=27 // pred_check
          %p1280 = pneg %p110
        $region38: #{conv_dw_block.3} parent=27 // pred_check_branch
          %1282 = sbr.rel (%p1280) target = $region40
        $region39: #{conv_dw_block.3} parent=27 // pred_region
          _
        $region40: #{conv_dw_block.3} parent=27 // pred_fallthru
          _
        // Predicated region
        $region41: #{conv_dw_block.3} parent=27 // pred_check
          %p1283 = pneg %p136
        $region42: #{conv_dw_block.3} parent=27 // pred_check_branch
          %1285 = sbr.rel (%p1283) target = $region44
        $region43: #{conv_dw_block.3} parent=27 // pred_region
          _
        $region44: #{conv_dw_block.3} parent=27 // pred_fallthru
          _
      $region28: #{conv_dw_block.3} parent=5 // pred_fallthru
        _
      %p1286 = scmp.le.s32.totalorder 2, %s14
      // Predicated region
      $region45: #{conv_dw_block.3} parent=5 // pred_check
        %p1287 = pneg %p1286
      $region46: #{conv_dw_block.3} parent=5 // pred_check_branch
        %1289 = sbr.rel (%p1287) target = $region48
      $region47: #{conv_dw_block.3} parent=5 // pred_region
        %s1290 = ssub.s32 %s14, 2
        // Predicated region
        $region49: #{conv_dw_block.3} parent=47 // pred_check
          %p1291 = pneg %p90
        $region50: #{conv_dw_block.3} parent=47 // pred_check_branch
          %1293 = sbr.rel (%p1291) target = $region52
        $region51: #{conv_dw_block.3} parent=47 // pred_region
          %p1294 = scmp.lt.s32.totalorder %s20, 1
          %s1295 = scalar_select %p1294, %s20, 1
          %s1296 = smul.addr %s1295, 2
          %s1297 = smul.addr %s1296, 4
          %s1298 = scalar_lea.vmem %s2, %s1297
        $region52: #{conv_dw_block.3} parent=47 // pred_fallthru
          _
        // Predicated region
        $region53: #{conv_dw_block.3} parent=47 // pred_check
          %p1299 = pneg %p116
        $region54: #{conv_dw_block.3} parent=47 // pred_check_branch
          %1301 = sbr.rel (%p1299) target = $region56
        $region55: #{conv_dw_block.3} parent=47 // pred_region
          %p1302 = scmp.lt.s32.totalorder %s20, 1
          %s1303 = scalar_select %p1302, %s20, 1
          %s1304 = smul.addr %s1303, 4
          %s1305 = scalar_lea.vmem %s3, %s1304
        $region56: #{conv_dw_block.3} parent=47 // pred_fallthru
          _
        // Predicated region
        $region57: #{conv_dw_block.3} parent=47 // pred_check
          %p1306 = pneg %p142
        $region58: #{conv_dw_block.3} parent=47 // pred_check_branch
          %1308 = sbr.rel (%p1306) target = $region60
        $region59: #{conv_dw_block.3} parent=47 // pred_region
          %p1309 = scmp.lt.s32.totalorder %s20, 1
          %s1310 = scalar_select %p1309, %s20, 1
          %s1311 = smul.addr %s1310, 4
          %s1312 = scalar_lea.vmem %s4, %s1311
        $region60: #{conv_dw_block.3} parent=47 // pred_fallthru
          _
      $region48: #{conv_dw_block.3} parent=5 // pred_fallthru
        _
    $region6: #{conv_dw_block.3} parent=1 // loop_footer
      %s18 = sadd.s32 1, %s14
    $region7: #{conv_dw_block.3} parent=1 // loop_footer_branch
      %13 = sbr.rel target = $region3
    $region8: #{conv_dw_block.3} parent=1 // loop_exit
      _
    %1313 = vsyncpa [#allocation4], 1
    %s1314 = scalar_lea.sflag [#allocation4], 1
    %1315 = vsyncpa %s1314, 1

</llo_original>
